<compile_context>
chip_gen: v7x
topology: tpu7x:2x2x1
jax: 0.10.0
libtpu: 0.0.40
codegen_flags: <defaults>
</compile_context>

<pallas_src>
import functools

import jax
import jax.numpy as jnp
from jax.experimental import pallas as pl
from jax.experimental.pallas import tpu as pltpu


# --------------------------------------------------------------------------------------
# Fused HimGCRU cell kernel (single invocation, whole batch)
# --------------------------------------------------------------------------------------
def _himgcru_kernel(x_ref, h_ref, A_ref, emb_ref, wx_ref, gwh_ref, uwh_ref,
                    out_ref, mh_ref, *, cheb_k, mxu_dtype):
    f32 = jnp.float32
    x = x_ref[...].astype(f32)        # (R, C)   R = B*N rows on sublanes
    h = h_ref[...].astype(f32)        # (R, H)
    A = A_ref[...]                    # (R, R)   f32 block-diagonal support
    emb = emb_ref[...]                # (R, D)   f32 node embeddings (batch-tiled)
    R, H = h.shape
    D = emb.shape[-1]
    P = mh_ref.shape[-1] // D         # padded per-d h-chunk width (multiple of 128)

    def mm_f32(a, b):                 # Chebyshev propagation dots: keep f32 (tiny)
        return jnp.dot(a, b, preferred_element_type=f32)

    def mm_pool(a, b):                # pool matmuls: mxu_dtype operands, f32 acc
        return jnp.dot(a.astype(mxu_dtype), b, preferred_element_type=f32)

    def cheb(v, width):
        """[T0(v) | T1(v) | ... | T_{K-1}(v) | zero-pad] -> (R, width)."""
        terms = [v, mm_f32(A, v)]
        for _ in range(2, cheb_k):
            terms.append(2.0 * mm_f32(A, terms[-1]) - terms[-2])
        pad = width - cheb_k * v.shape[-1]
        if pad > 0:
            terms.append(jnp.zeros((v.shape[0], pad), f32))
        return jnp.concatenate(terms, axis=-1)

    # Hoisted emb column broadcasts, reused for mx, M_h and M_{z*h} builds.
    eb = [jnp.broadcast_to(emb[:, d:d + 1], (R, P)) for d in range(D)]

    def fill_mh(xg):
        # Whole-vreg (128-lane aligned) writes of each d-chunk into the scratch LHS.
        for d in range(D):
            mh_ref[:, d * P:(d + 1) * P] = eb[d] * xg

    # ---- x contributions (shared by gate & update GCN) -----------------------------
    xgx = cheb(x, cheb_k * x.shape[-1])                         # (R, K*C)
    kcx = xgx.shape[-1]
    # x LHS: [emb-weighted T(x) in (d,k,c) order | emb (bias fold)]; built once, small.
    mx = jnp.concatenate([eb[d][:, :kcx] * xgx for d in range(D)] + [emb], axis=-1)
    cx = mm_pool(mx, wx_ref[...])                               # (R, 3H): [gate 2H | update H]

    # ---- gate: z, r = sigmoid(GCN([x, h])) ------------------------------------------
    fill_mh(cheb(h, P))
    gh = mm_pool(mh_ref[...], gwh_ref[...])                     # (R, 2H)
    zr = jax.nn.sigmoid(cx[:, :2 * H] + gh)
    z = zr[:, :H]
    r = zr[:, H:]

    # ---- candidate: hc = tanh(GCN([x, z*h]))  (x part cx reused) --------------------
    fill_mh(cheb(z * h, P))
    uh = mm_pool(mh_ref[...], uwh_ref[...])                     # (R, H)
    hc = jnp.tanh(cx[:, 2 * H:] + uh)

    # ---- h' = r*h + (1-r)*hc ---------------------------------------------------------
    out_ref[...] = (r * h + (1.0 - r) * hc).astype(out_ref.dtype)


# --------------------------------------------------------------------------------------
# Wrapper: weight-pool preparation + pallas_call launch
# --------------------------------------------------------------------------------------
def _prep_pools(gate_wp, gate_bp, upd_wp, upd_bp, C, H, cheb_k, P, mxu_dtype):
    """Split pools into x / h column blocks, pad h-chunks to P rows, fuse biases."""
    D = gate_wp.shape[0]

    def split(wp):
        Dd, KC, O = wp.shape
        assert KC == cheb_k * (C + H)
        wp4 = wp.reshape(Dd, cheb_k, C + H, O)
        wx = wp4[:, :, :C, :].reshape(Dd * cheb_k * C, O)        # (D*K*C, O)  (d,k,c)
        wh = wp4[:, :, C:, :].reshape(Dd, cheb_k * H, O)         # (D, K*H, O)
        wh = jnp.pad(wh, ((0, 0), (0, P - cheb_k * H), (0, 0)))  # zero rows -> P per d
        return wx, wh.reshape(Dd * P, O)

    gwx, gwh = split(gate_wp)     # (D*K*C, 2H), (D*P, 2H)
    uwx, uwh = split(upd_wp)      # (D*K*C,  H), (D*P,  H)

    # One RHS for all x-contributions + both bias pools:
    #   rows = [x-weight rows (d,k,c) ; bias-pool rows (d)], cols = [gate 2H | update H]
    wx_all = jnp.concatenate(
        [jnp.concatenate([gwx, uwx], axis=1),
         jnp.concatenate([gate_bp, upd_bp], axis=1)], axis=0)    # (D*K*C + D, 3H)

    return (wx_all.astype(mxu_dtype), gwh.astype(mxu_dtype), uwh.astype(mxu_dtype))


def himgcru_pallas(x, state, support, embeddings,
                   gate_wp, gate_bp, upd_wp, upd_bp, cheb_k,
                   *, mxu_dtype=jnp.bfloat16, donate_state=False):
    assert cheb_k >= 2, "HimGCN Chebyshev expansion requires cheb_k >= 2"
    B, N, C = x.shape
    H = state.shape[-1]
    D = embeddings.shape[-1]
    R = B * N
    P = ((cheb_k * H + 127) // 128) * 128        # padded per-d h-chunk width

    f32 = jnp.float32
    x2 = x.reshape(R, C)
    h2 = state.reshape(R, H)                     # keeps state.dtype (alias-safe)
    A_blk = jnp.kron(jnp.eye(B, dtype=f32), support.astype(f32))   # (R, R) block-diag
    emb_t = jnp.tile(embeddings.astype(f32), (B, 1))               # (R, D)
    wx_all, gwh_p, uwh_p = _prep_pools(gate_wp, gate_bp, upd_wp, upd_bp,
                                       C, H, cheb_k, P, mxu_dtype)

    operands = (x2, h2, A_blk, emb_t, wx_all, gwh_p, uwh_p)

    # VMEM limit from the actual footprint (4x headroom), capped below v7x's
    # scoped default so we never starve surrounding fusions / the other core.
    nbytes = lambda a: int(a.size) * jnp.dtype(a.dtype).itemsize
    footprint = sum(nbytes(a) for a in operands) + R * D * P * 4 + R * H * 4
    vmem_limit = int(min(max(8 * 2**20, 4 * footprint), 32 * 2**20))

    kernel = functools.partial(_himgcru_kernel, cheb_k=cheb_k, mxu_dtype=mxu_dtype)
    out = pl.pallas_call(
        kernel,
        out_shape=jax.ShapeDtypeStruct((R, H), state.dtype),
        scratch_shapes=[pltpu.VMEM((R, D * P), f32)],
        # Alias h' onto the recurrent-state operand when scanning this cell over time.
        input_output_aliases=({1: 0} if donate_state else {}),
        compiler_params=pltpu.CompilerParams(vmem_limit_bytes=vmem_limit),
    )(*operands)
    return out.reshape(B, N, H)


# --------------------------------------------------------------------------------------
# Pure-JAX reference (mirrors the PyTorch forward) for correctness checking
# --------------------------------------------------------------------------------------
def _himgcn_ref(x, support, emb, wp, bp, cheb_k):
    N = support.shape[0]
    graphs = [jnp.eye(N, dtype=support.dtype), support]
    for _ in range(2, cheb_k):
        graphs.append(2.0 * support @ graphs[-1] - graphs[-2])
    x_g = jnp.concatenate([jnp.einsum('nm,bmc->bnc', g, x) for g in graphs], axis=-1)
    W = jnp.einsum('nd,dio->nio', emb, wp)
    b = emb @ bp
    return jnp.einsum('bni,nio->bno', x_g, W) + b


def _himgcru_ref(x, state, support, emb, gwp, gbp, uwp, ubp, cheb_k):
    H = state.shape[-1]
    ins = jnp.concatenate([x, state], axis=-1)
    zr = jax.nn.sigmoid(_himgcn_ref(ins, support, emb, gwp, gbp, cheb_k))
    z, r = zr[..., :H], zr[..., H:]
    cand = jnp.concatenate([x, z * state], axis=-1)
    hc = jnp.tanh(_himgcn_ref(cand, support, emb, uwp, ubp, cheb_k))
    return r * state + (1.0 - r) * hc


# --------------------------------------------------------------------------------------
# Deterministic parameter init (xavier-normal-like, matching the module's shapes)
# --------------------------------------------------------------------------------------
def _xavier_normal(key, shape):
    rf = 1
    for s in shape[2:]:
        rf *= s
    fan_in = shape[1] * rf
    fan_out = shape[0] * rf
    std = (2.0 / (fan_in + fan_out)) ** 0.5
    return std * jax.random.normal(key, shape, jnp.float32)


if __name__ == "__main__":
    # num_nodes=16, input_dim=4, hidden/output_dim=32, cheb_k=3, embed_dim=8, batch=2
    B, N, C, H, K, D = 2, 16, 4, 32, 3, 8
    Cin = C + H  # HimGCN input dim = input_dim + hidden_dim

    key = jax.random.PRNGKey(0)
    ks = jax.random.split(key, 8)
    x = jax.random.normal(ks[0], (B, N, C), jnp.float32)
    state = jax.random.normal(ks[1], (B, N, H), jnp.float32)
    support = jax.nn.softmax(jax.random.normal(ks[2], (N, N), jnp.float32), axis=-1)
    emb = jax.random.normal(ks[3], (N, D), jnp.float32)

    gate_wp = _xavier_normal(ks[4], (D, K * Cin, 2 * H))   # gate.weights_pool
    gate_bp = _xavier_normal(ks[5], (D, 2 * H))            # gate.bias_pool
    upd_wp = _xavier_normal(ks[6], (D, K * Cin, H))        # update.weights_pool
    upd_bp = _xavier_normal(ks[7], (D, H))                 # update.bias_pool

    h_ref = _himgcru_ref(x, state, support, emb, gate_wp, gate_bp, upd_wp, upd_bp, K)

    # Default path: bf16 pool-matmul operands, f32 accumulation & propagation.
    h_bf16 = himgcru_pallas(x, state, support, emb, gate_wp, gate_bp, upd_wp, upd_bp, K)
    jax.block_until_ready(h_bf16)
    err_bf16 = float(jnp.max(jnp.abs(h_bf16 - h_ref)))
    assert h_bf16.shape == (B, N, H)
    assert jnp.allclose(h_bf16, h_ref, atol=5e-2, rtol=5e-2), \
        f"bf16 path max abs err = {err_bf16}"

    # Full-f32 path: tight tolerance against the reference.
    h_f32 = himgcru_pallas(x, state, support, emb, gate_wp, gate_bp, upd_wp, upd_bp, K,
                           mxu_dtype=jnp.float32)
    jax.block_until_ready(h_f32)
    err_f32 = float(jnp.max(jnp.abs(h_f32 - h_ref)))
    assert jnp.allclose(h_f32, h_ref, atol=1e-3, rtol=1e-3), \
        f"f32 path max abs err = {err_f32}"

    print("KERNEL_OK")
</pallas_src>

<mosaic_0001>
module attributes {stable_mosaic.version = 11 : i64} {
  func.func @_himgcru_kernel(%arg0: memref<32x4xf32, #tpu.memory_space<vmem>>, %arg1: memref<32x32xf32, #tpu.memory_space<vmem>>, %arg2: memref<32x32xf32, #tpu.memory_space<vmem>>, %arg3: memref<32x8xf32, #tpu.memory_space<vmem>>, %arg4: memref<104x96xbf16, #tpu.memory_space<vmem>>, %arg5: memref<1024x64xbf16, #tpu.memory_space<vmem>>, %arg6: memref<1024x32xbf16, #tpu.memory_space<vmem>>, %arg7: memref<32x32xf32, #tpu.memory_space<vmem>>, %arg8: memref<32x1024xf32, #tpu.memory_space<vmem>>) attributes {dimension_semantics = [], scalar_prefetch = 0 : i64, scratch_operands = 1 : i64, tpu.core_type = #tpu.core_type<tc>} {
    %c0 = arith.constant 0 : index
    %c0_0 = arith.constant 0 : index
    %0 = vector.load %arg0[%c0, %c0_0] : memref<32x4xf32, #tpu.memory_space<vmem>>, vector<32x4xf32>
    %c0_1 = arith.constant 0 : index
    %c0_2 = arith.constant 0 : index
    %1 = vector.load %arg1[%c0_1, %c0_2] : memref<32x32xf32, #tpu.memory_space<vmem>>, vector<32x32xf32>
    %c0_3 = arith.constant 0 : index
    %c0_4 = arith.constant 0 : index
    %2 = vector.load %arg2[%c0_3, %c0_4] : memref<32x32xf32, #tpu.memory_space<vmem>>, vector<32x32xf32>
    %c0_5 = arith.constant 0 : index
    %c0_6 = arith.constant 0 : index
    %3 = vector.load %arg3[%c0_5, %c0_6] : memref<32x8xf32, #tpu.memory_space<vmem>>, vector<32x8xf32>
    %4 = vector.extract_strided_slice %3 {offsets = [0, 0], sizes = [32, 1], strides = [1, 1]} : vector<32x8xf32> to vector<32x1xf32>
    %5 = vector.shape_cast %4 : vector<32x1xf32> to vector<32x1xf32>
    %6 = vector.broadcast %5 : vector<32x1xf32> to vector<32x128xf32>
    %7 = vector.extract_strided_slice %3 {offsets = [0, 1], sizes = [32, 1], strides = [1, 1]} : vector<32x8xf32> to vector<32x1xf32>
    %8 = vector.shape_cast %7 : vector<32x1xf32> to vector<32x1xf32>
    %9 = vector.broadcast %8 : vector<32x1xf32> to vector<32x128xf32>
    %10 = vector.extract_strided_slice %3 {offsets = [0, 2], sizes = [32, 1], strides = [1, 1]} : vector<32x8xf32> to vector<32x1xf32>
    %11 = vector.shape_cast %10 : vector<32x1xf32> to vector<32x1xf32>
    %12 = vector.broadcast %11 : vector<32x1xf32> to vector<32x128xf32>
    %13 = vector.extract_strided_slice %3 {offsets = [0, 3], sizes = [32, 1], strides = [1, 1]} : vector<32x8xf32> to vector<32x1xf32>
    %14 = vector.shape_cast %13 : vector<32x1xf32> to vector<32x1xf32>
    %15 = vector.broadcast %14 : vector<32x1xf32> to vector<32x128xf32>
    %16 = vector.extract_strided_slice %3 {offsets = [0, 4], sizes = [32, 1], strides = [1, 1]} : vector<32x8xf32> to vector<32x1xf32>
    %17 = vector.shape_cast %16 : vector<32x1xf32> to vector<32x1xf32>
    %18 = vector.broadcast %17 : vector<32x1xf32> to vector<32x128xf32>
    %19 = vector.extract_strided_slice %3 {offsets = [0, 5], sizes = [32, 1], strides = [1, 1]} : vector<32x8xf32> to vector<32x1xf32>
    %20 = vector.shape_cast %19 : vector<32x1xf32> to vector<32x1xf32>
    %21 = vector.broadcast %20 : vector<32x1xf32> to vector<32x128xf32>
    %22 = vector.extract_strided_slice %3 {offsets = [0, 6], sizes = [32, 1], strides = [1, 1]} : vector<32x8xf32> to vector<32x1xf32>
    %23 = vector.shape_cast %22 : vector<32x1xf32> to vector<32x1xf32>
    %24 = vector.broadcast %23 : vector<32x1xf32> to vector<32x128xf32>
    %25 = vector.extract_strided_slice %3 {offsets = [0, 7], sizes = [32, 1], strides = [1, 1]} : vector<32x8xf32> to vector<32x1xf32>
    %26 = vector.shape_cast %25 : vector<32x1xf32> to vector<32x1xf32>
    %27 = vector.broadcast %26 : vector<32x1xf32> to vector<32x128xf32>
    %cst = arith.constant dense<0.000000e+00> : vector<32x4xf32>
    %28 = tpu.matmul %2, %0, %cst {dimension_numbers = #tpu.dot_dimension_numbers<[1], [0], [0], [1], [0, 0, 1, 1], [], []>} : vector<32x32xf32>, vector<32x4xf32>, vector<32x4xf32> -> vector<32x4xf32>
    %cst_7 = arith.constant dense<0.000000e+00> : vector<32x4xf32>
    %29 = tpu.matmul %2, %28, %cst_7 {dimension_numbers = #tpu.dot_dimension_numbers<[1], [0], [0], [1], [0, 0, 1, 1], [], []>} : vector<32x32xf32>, vector<32x4xf32>, vector<32x4xf32> -> vector<32x4xf32>
    %cst_8 = arith.constant 2.000000e+00 : f32
    %30 = vector.broadcast %cst_8 : f32 to vector<32x4xf32>
    %31 = arith.mulf %30, %29 : vector<32x4xf32>
    %32 = arith.subf %31, %0 : vector<32x4xf32>
    %33 = tpu.concatenate %0, %28, %32 in 1 : vector<32x4xf32>, vector<32x4xf32>, vector<32x4xf32> -> vector<32x12xf32>
    %34 = vector.extract_strided_slice %6 {offsets = [0, 0], sizes = [32, 12], strides = [1, 1]} : vector<32x128xf32> to vector<32x12xf32>
    %35 = arith.mulf %34, %33 : vector<32x12xf32>
    %36 = vector.extract_strided_slice %9 {offsets = [0, 0], sizes = [32, 12], strides = [1, 1]} : vector<32x128xf32> to vector<32x12xf32>
    %37 = arith.mulf %36, %33 : vector<32x12xf32>
    %38 = vector.extract_strided_slice %12 {offsets = [0, 0], sizes = [32, 12], strides = [1, 1]} : vector<32x128xf32> to vector<32x12xf32>
    %39 = arith.mulf %38, %33 : vector<32x12xf32>
    %40 = vector.extract_strided_slice %15 {offsets = [0, 0], sizes = [32, 12], strides = [1, 1]} : vector<32x128xf32> to vector<32x12xf32>
    %41 = arith.mulf %40, %33 : vector<32x12xf32>
    %42 = vector.extract_strided_slice %18 {offsets = [0, 0], sizes = [32, 12], strides = [1, 1]} : vector<32x128xf32> to vector<32x12xf32>
    %43 = arith.mulf %42, %33 : vector<32x12xf32>
    %44 = vector.extract_strided_slice %21 {offsets = [0, 0], sizes = [32, 12], strides = [1, 1]} : vector<32x128xf32> to vector<32x12xf32>
    %45 = arith.mulf %44, %33 : vector<32x12xf32>
    %46 = vector.extract_strided_slice %24 {offsets = [0, 0], sizes = [32, 12], strides = [1, 1]} : vector<32x128xf32> to vector<32x12xf32>
    %47 = arith.mulf %46, %33 : vector<32x12xf32>
    %48 = vector.extract_strided_slice %27 {offsets = [0, 0], sizes = [32, 12], strides = [1, 1]} : vector<32x128xf32> to vector<32x12xf32>
    %49 = arith.mulf %48, %33 : vector<32x12xf32>
    %50 = tpu.concatenate %35, %37, %39, %41, %43, %45, %47, %49, %3 in 1 : vector<32x12xf32>, vector<32x12xf32>, vector<32x12xf32>, vector<32x12xf32>, vector<32x12xf32>, vector<32x12xf32>, vector<32x12xf32>, vector<32x12xf32>, vector<32x8xf32> -> vector<32x104xf32>
    %c0_9 = arith.constant 0 : index
    %c0_10 = arith.constant 0 : index
    %51 = vector.load %arg4[%c0_9, %c0_10] : memref<104x96xbf16, #tpu.memory_space<vmem>>, vector<104x96xbf16>
    %52 = arith.truncf %50 : vector<32x104xf32> to vector<32x104xbf16>
    %cst_11 = arith.constant dense<0.000000e+00> : vector<32x96xf32>
    %53 = tpu.matmul %52, %51, %cst_11 {dimension_numbers = #tpu.dot_dimension_numbers<[1], [0], [0], [1], [0, 0, 1, 1], [], []>} : vector<32x104xbf16>, vector<104x96xbf16>, vector<32x96xf32> -> vector<32x96xf32>
    %cst_12 = arith.constant dense<0.000000e+00> : vector<32x32xf32>
    %54 = tpu.matmul %2, %1, %cst_12 {dimension_numbers = #tpu.dot_dimension_numbers<[1], [0], [0], [1], [0, 0, 1, 1], [], []>} : vector<32x32xf32>, vector<32x32xf32>, vector<32x32xf32> -> vector<32x32xf32>
    %cst_13 = arith.constant dense<0.000000e+00> : vector<32x32xf32>
    %55 = tpu.matmul %2, %54, %cst_13 {dimension_numbers = #tpu.dot_dimension_numbers<[1], [0], [0], [1], [0, 0, 1, 1], [], []>} : vector<32x32xf32>, vector<32x32xf32>, vector<32x32xf32> -> vector<32x32xf32>
    %cst_14 = arith.constant 2.000000e+00 : f32
    %56 = vector.broadcast %cst_14 : f32 to vector<32x32xf32>
    %57 = arith.mulf %56, %55 : vector<32x32xf32>
    %58 = arith.subf %57, %1 : vector<32x32xf32>
    %cst_15 = arith.constant 0.000000e+00 : f32
    %59 = vector.broadcast %cst_15 : f32 to vector<32x32xf32>
    %60 = tpu.concatenate %1, %54, %58, %59 in 1 : vector<32x32xf32>, vector<32x32xf32>, vector<32x32xf32>, vector<32x32xf32> -> vector<32x128xf32>
    %61 = arith.mulf %6, %60 : vector<32x128xf32>
    %c0_16 = arith.constant 0 : index
    %c0_17 = arith.constant 0 : index
    %62 = vector.load %arg8[%c0_16, %c0_17] : memref<32x1024xf32, #tpu.memory_space<vmem>>, vector<32x128xf32>
    tpu.vector_store %arg8[%c0_16, %c0_17], %61 {strides = array<i32>} : memref<32x1024xf32, #tpu.memory_space<vmem>>, vector<32x128xf32>,
    %63 = arith.mulf %9, %60 : vector<32x128xf32>
    %c0_18 = arith.constant 0 : index
    %c128 = arith.constant 128 : index
    %64 = vector.load %arg8[%c0_18, %c128] : memref<32x1024xf32, #tpu.memory_space<vmem>>, vector<32x128xf32>
    tpu.vector_store %arg8[%c0_18, %c128], %63 {strides = array<i32>} : memref<32x1024xf32, #tpu.memory_space<vmem>>, vector<32x128xf32>,
    %65 = arith.mulf %12, %60 : vector<32x128xf32>
    %c0_19 = arith.constant 0 : index
    %c256 = arith.constant 256 : index
    %66 = vector.load %arg8[%c0_19, %c256] : memref<32x1024xf32, #tpu.memory_space<vmem>>, vector<32x128xf32>
    tpu.vector_store %arg8[%c0_19, %c256], %65 {strides = array<i32>} : memref<32x1024xf32, #tpu.memory_space<vmem>>, vector<32x128xf32>,
    %67 = arith.mulf %15, %60 : vector<32x128xf32>
    %c0_20 = arith.constant 0 : index
    %c384 = arith.constant 384 : index
    %68 = vector.load %arg8[%c0_20, %c384] : memref<32x1024xf32, #tpu.memory_space<vmem>>, vector<32x128xf32>
    tpu.vector_store %arg8[%c0_20, %c384], %67 {strides = array<i32>} : memref<32x1024xf32, #tpu.memory_space<vmem>>, vector<32x128xf32>,
    %69 = arith.mulf %18, %60 : vector<32x128xf32>
    %c0_21 = arith.constant 0 : index
    %c512 = arith.constant 512 : index
    %70 = vector.load %arg8[%c0_21, %c512] : memref<32x1024xf32, #tpu.memory_space<vmem>>, vector<32x128xf32>
    tpu.vector_store %arg8[%c0_21, %c512], %69 {strides = array<i32>} : memref<32x1024xf32, #tpu.memory_space<vmem>>, vector<32x128xf32>,
    %71 = arith.mulf %21, %60 : vector<32x128xf32>
    %c0_22 = arith.constant 0 : index
    %c640 = arith.constant 640 : index
    %72 = vector.load %arg8[%c0_22, %c640] : memref<32x1024xf32, #tpu.memory_space<vmem>>, vector<32x128xf32>
    tpu.vector_store %arg8[%c0_22, %c640], %71 {strides = array<i32>} : memref<32x1024xf32, #tpu.memory_space<vmem>>, vector<32x128xf32>,
    %73 = arith.mulf %24, %60 : vector<32x128xf32>
    %c0_23 = arith.constant 0 : index
    %c768 = arith.constant 768 : index
    %74 = vector.load %arg8[%c0_23, %c768] : memref<32x1024xf32, #tpu.memory_space<vmem>>, vector<32x128xf32>
    tpu.vector_store %arg8[%c0_23, %c768], %73 {strides = array<i32>} : memref<32x1024xf32, #tpu.memory_space<vmem>>, vector<32x128xf32>,
    %75 = arith.mulf %27, %60 : vector<32x128xf32>
    %c0_24 = arith.constant 0 : index
    %c896 = arith.constant 896 : index
    %76 = vector.load %arg8[%c0_24, %c896] : memref<32x1024xf32, #tpu.memory_space<vmem>>, vector<32x128xf32>
    tpu.vector_store %arg8[%c0_24, %c896], %75 {strides = array<i32>} : memref<32x1024xf32, #tpu.memory_space<vmem>>, vector<32x128xf32>,
    %c0_25 = arith.constant 0 : index
    %c0_26 = arith.constant 0 : index
    %77 = vector.load %arg8[%c0_25, %c0_26] : memref<32x1024xf32, #tpu.memory_space<vmem>>, vector<32x1024xf32>
    %c0_27 = arith.constant 0 : index
    %c0_28 = arith.constant 0 : index
    %78 = vector.load %arg5[%c0_27, %c0_28] : memref<1024x64xbf16, #tpu.memory_space<vmem>>, vector<1024x64xbf16>
    %79 = arith.truncf %77 : vector<32x1024xf32> to vector<32x1024xbf16>
    %cst_29 = arith.constant dense<0.000000e+00> : vector<32x64xf32>
    %80 = tpu.matmul %79, %78, %cst_29 {dimension_numbers = #tpu.dot_dimension_numbers<[1], [0], [0], [1], [0, 0, 1, 1], [], []>} : vector<32x1024xbf16>, vector<1024x64xbf16>, vector<32x64xf32> -> vector<32x64xf32>
    %81 = vector.extract_strided_slice %53 {offsets = [0, 0], sizes = [32, 64], strides = [1, 1]} : vector<32x96xf32> to vector<32x64xf32>
    %82 = arith.addf %81, %80 : vector<32x64xf32>
    %83 = arith.negf %82 : vector<32x64xf32>
    %84 = math.exp %83 : vector<32x64xf32>
    %cst_30 = arith.constant 1.000000e+00 : f32
    %85 = vector.broadcast %cst_30 : f32 to vector<32x64xf32>
    %86 = arith.addf %85, %84 : vector<32x64xf32>
    %87 = arith.divf %85, %86 : vector<32x64xf32>
    %88 = vector.extract_strided_slice %87 {offsets = [0, 0], sizes = [32, 32], strides = [1, 1]} : vector<32x64xf32> to vector<32x32xf32>
    %89 = vector.extract_strided_slice %87 {offsets = [0, 32], sizes = [32, 32], strides = [1, 1]} : vector<32x64xf32> to vector<32x32xf32>
    %90 = arith.mulf %88, %1 : vector<32x32xf32>
    %cst_31 = arith.constant dense<0.000000e+00> : vector<32x32xf32>
    %91 = tpu.matmul %2, %90, %cst_31 {dimension_numbers = #tpu.dot_dimension_numbers<[1], [0], [0], [1], [0, 0, 1, 1], [], []>} : vector<32x32xf32>, vector<32x32xf32>, vector<32x32xf32> -> vector<32x32xf32>
    %cst_32 = arith.constant dense<0.000000e+00> : vector<32x32xf32>
    %92 = tpu.matmul %2, %91, %cst_32 {dimension_numbers = #tpu.dot_dimension_numbers<[1], [0], [0], [1], [0, 0, 1, 1], [], []>} : vector<32x32xf32>, vector<32x32xf32>, vector<32x32xf32> -> vector<32x32xf32>
    %cst_33 = arith.constant 2.000000e+00 : f32
    %93 = vector.broadcast %cst_33 : f32 to vector<32x32xf32>
    %94 = arith.mulf %93, %92 : vector<32x32xf32>
    %95 = arith.subf %94, %90 : vector<32x32xf32>
    %cst_34 = arith.constant 0.000000e+00 : f32
    %96 = vector.broadcast %cst_34 : f32 to vector<32x32xf32>
    %97 = tpu.concatenate %90, %91, %95, %96 in 1 : vector<32x32xf32>, vector<32x32xf32>, vector<32x32xf32>, vector<32x32xf32> -> vector<32x128xf32>
    %98 = arith.mulf %6, %97 : vector<32x128xf32>
    %c0_35 = arith.constant 0 : index
    %c0_36 = arith.constant 0 : index
    %99 = vector.load %arg8[%c0_35, %c0_36] : memref<32x1024xf32, #tpu.memory_space<vmem>>, vector<32x128xf32>
    tpu.vector_store %arg8[%c0_35, %c0_36], %98 {strides = array<i32>} : memref<32x1024xf32, #tpu.memory_space<vmem>>, vector<32x128xf32>,
    %100 = arith.mulf %9, %97 : vector<32x128xf32>
    %c0_37 = arith.constant 0 : index
    %c128_38 = arith.constant 128 : index
    %101 = vector.load %arg8[%c0_37, %c128_38] : memref<32x1024xf32, #tpu.memory_space<vmem>>, vector<32x128xf32>
    tpu.vector_store %arg8[%c0_37, %c128_38], %100 {strides = array<i32>} : memref<32x1024xf32, #tpu.memory_space<vmem>>, vector<32x128xf32>,
    %102 = arith.mulf %12, %97 : vector<32x128xf32>
    %c0_39 = arith.constant 0 : index
    %c256_40 = arith.constant 256 : index
    %103 = vector.load %arg8[%c0_39, %c256_40] : memref<32x1024xf32, #tpu.memory_space<vmem>>, vector<32x128xf32>
    tpu.vector_store %arg8[%c0_39, %c256_40], %102 {strides = array<i32>} : memref<32x1024xf32, #tpu.memory_space<vmem>>, vector<32x128xf32>,
    %104 = arith.mulf %15, %97 : vector<32x128xf32>
    %c0_41 = arith.constant 0 : index
    %c384_42 = arith.constant 384 : index
    %105 = vector.load %arg8[%c0_41, %c384_42] : memref<32x1024xf32, #tpu.memory_space<vmem>>, vector<32x128xf32>
    tpu.vector_store %arg8[%c0_41, %c384_42], %104 {strides = array<i32>} : memref<32x1024xf32, #tpu.memory_space<vmem>>, vector<32x128xf32>,
    %106 = arith.mulf %18, %97 : vector<32x128xf32>
    %c0_43 = arith.constant 0 : index
    %c512_44 = arith.constant 512 : index
    %107 = vector.load %arg8[%c0_43, %c512_44] : memref<32x1024xf32, #tpu.memory_space<vmem>>, vector<32x128xf32>
    tpu.vector_store %arg8[%c0_43, %c512_44], %106 {strides = array<i32>} : memref<32x1024xf32, #tpu.memory_space<vmem>>, vector<32x128xf32>,
    %108 = arith.mulf %21, %97 : vector<32x128xf32>
    %c0_45 = arith.constant 0 : index
    %c640_46 = arith.constant 640 : index
    %109 = vector.load %arg8[%c0_45, %c640_46] : memref<32x1024xf32, #tpu.memory_space<vmem>>, vector<32x128xf32>
    tpu.vector_store %arg8[%c0_45, %c640_46], %108 {strides = array<i32>} : memref<32x1024xf32, #tpu.memory_space<vmem>>, vector<32x128xf32>,
    %110 = arith.mulf %24, %97 : vector<32x128xf32>
    %c0_47 = arith.constant 0 : index
    %c768_48 = arith.constant 768 : index
    %111 = vector.load %arg8[%c0_47, %c768_48] : memref<32x1024xf32, #tpu.memory_space<vmem>>, vector<32x128xf32>
    tpu.vector_store %arg8[%c0_47, %c768_48], %110 {strides = array<i32>} : memref<32x1024xf32, #tpu.memory_space<vmem>>, vector<32x128xf32>,
    %112 = arith.mulf %27, %97 : vector<32x128xf32>
    %c0_49 = arith.constant 0 : index
    %c896_50 = arith.constant 896 : index
    %113 = vector.load %arg8[%c0_49, %c896_50] : memref<32x1024xf32, #tpu.memory_space<vmem>>, vector<32x128xf32>
    tpu.vector_store %arg8[%c0_49, %c896_50], %112 {strides = array<i32>} : memref<32x1024xf32, #tpu.memory_space<vmem>>, vector<32x128xf32>,
    %c0_51 = arith.constant 0 : index
    %c0_52 = arith.constant 0 : index
    %114 = vector.load %arg8[%c0_51, %c0_52] : memref<32x1024xf32, #tpu.memory_space<vmem>>, vector<32x1024xf32>
    %c0_53 = arith.constant 0 : index
    %c0_54 = arith.constant 0 : index
    %115 = vector.load %arg6[%c0_53, %c0_54] : memref<1024x32xbf16, #tpu.memory_space<vmem>>, vector<1024x32xbf16>
    %116 = arith.truncf %114 : vector<32x1024xf32> to vector<32x1024xbf16>
    %cst_55 = arith.constant dense<0.000000e+00> : vector<32x32xf32>
    %117 = tpu.matmul %116, %115, %cst_55 {dimension_numbers = #tpu.dot_dimension_numbers<[1], [0], [0], [1], [0, 0, 1, 1], [], []>} : vector<32x1024xbf16>, vector<1024x32xbf16>, vector<32x32xf32> -> vector<32x32xf32>
    %118 = vector.extract_strided_slice %53 {offsets = [0, 64], sizes = [32, 32], strides = [1, 1]} : vector<32x96xf32> to vector<32x32xf32>
    %119 = arith.addf %118, %117 : vector<32x32xf32>
    %120 = math.tanh %119 : vector<32x32xf32>
    %121 = arith.mulf %89, %1 : vector<32x32xf32>
    %cst_56 = arith.constant 1.000000e+00 : f32
    %122 = vector.broadcast %cst_56 : f32 to vector<32x32xf32>
    %123 = arith.subf %122, %89 : vector<32x32xf32>
    %124 = arith.mulf %123, %120 : vector<32x32xf32>
    %125 = arith.addf %121, %124 : vector<32x32xf32>
    %c0_57 = arith.constant 0 : index
    %c0_58 = arith.constant 0 : index
    %126 = vector.load %arg7[%c0_57, %c0_58] : memref<32x32xf32, #tpu.memory_space<vmem>>, vector<32x32xf32>
    tpu.vector_store %arg7[%c0_57, %c0_58], %125 {strides = array<i32>} : memref<32x32xf32, #tpu.memory_space<vmem>>, vector<32x32xf32>,
    return
  }
}

</mosaic_0001>

<llo_original>
// kernel: tpu_custom_call.1
$region0: #{tpu_custom_call.1}
  #allocation0 [shape = 'u32[]', space=smem, size = 0x4, offset = 0x4, fixed_abs, tag = 'smem constant byte address 0x4 - core index']
  #allocation1 [shape = 'u32[144,128]{1,0:T(1,128)}', space=vmem, size = 0x12000, scoped, tag = 'internal scratch']
  #allocation2 [shape = 'f32[32,1024]{1,0:T(8,128)}', space=vmem, size = 0x20000, scoped, tag = 'scratch operand']
  %s0 = inlined_call_operand.vmem [shape: f32[32,4], index: 0, kind: input, shape index: {}]
  %s1 = inlined_call_operand.vmem [shape: f32[32,32], index: 1, kind: input, shape index: {}]
  %s2 = inlined_call_operand.vmem [shape: f32[32,32], index: 2, kind: input, shape index: {}]
  %s3 = inlined_call_operand.vmem [shape: f32[32,8], index: 3, kind: input, shape index: {}]
  %s4 = inlined_call_operand.vmem [shape: bf16[104,96], index: 4, kind: input, shape index: {}]
  %s5 = inlined_call_operand.vmem [shape: bf16[1024,64], index: 5, kind: input, shape index: {}]
  %s6 = inlined_call_operand.vmem [shape: bf16[1024,32], index: 6, kind: input, shape index: {}]
  %s7 = inlined_call_operand.hbm [shape: f32[32,32], index: 7, kind: output, shape index: {}]
  %s8 = sld [smem:[#allocation0]]
  $region38: #{tpu_custom_call.1} parent=0
    _
  %s10 = ssub.s32 1, %s8
  %s11 = scalar_select 0, %s10, %s8
  $region1: #{tpu_custom_call.1} parent=0
    #allocation3 [shape = 'u8[16384]{0}', space=vmem, size = 0x4000, scoped, tag = 'output window, operand 0, single buffered']
    #allocation4 [shape = 's32[1]{0}', space=sflag, size = 0x4, scoped, tag = 'scoped memory for tpu_custom_call.1']
    %12 = vsyncpa [#allocation4], 0
    // Predicated region
    $region2: #{tpu_custom_call.1} parent=1 // pred_check
      _
    $region3: #{tpu_custom_call.1} parent=1 // pred_check_branch
      %14 = sbr.rel (0) target = $region5
    $region4: #{tpu_custom_call.1} parent=1 // pred_region
      _
    $region5: #{tpu_custom_call.1} parent=1 // pred_fallthru
      _
    // Predicated region
    $region6: #{tpu_custom_call.1} parent=1 // pred_check
      _
    $region7: #{tpu_custom_call.1} parent=1 // pred_check_branch
      %16 = sbr.rel (0) target = $region9
    $region8: #{tpu_custom_call.1} parent=1 // pred_region
      _
    $region9: #{tpu_custom_call.1} parent=1 // pred_fallthru
      _
    // Predicated region
    $region10: #{tpu_custom_call.1} parent=1 // pred_check
      _
    $region11: #{tpu_custom_call.1} parent=1 // pred_check_branch
      %18 = sbr.rel (0) target = $region13
    $region12: #{tpu_custom_call.1} parent=1 // pred_region
      _
    $region13: #{tpu_custom_call.1} parent=1 // pred_fallthru
      _
    // Predicated region
    $region14: #{tpu_custom_call.1} parent=1 // pred_check
      _
    $region15: #{tpu_custom_call.1} parent=1 // pred_check_branch
      %20 = sbr.rel (0) target = $region17
    $region16: #{tpu_custom_call.1} parent=1 // pred_region
      _
    $region17: #{tpu_custom_call.1} parent=1 // pred_fallthru
      _
    // Predicated region
    $region18: #{tpu_custom_call.1} parent=1 // pred_check
      _
    $region19: #{tpu_custom_call.1} parent=1 // pred_check_branch
      %22 = sbr.rel (0) target = $region21
    $region20: #{tpu_custom_call.1} parent=1 // pred_region
      _
    $region21: #{tpu_custom_call.1} parent=1 // pred_fallthru
      _
    // Predicated region
    $region22: #{tpu_custom_call.1} parent=1 // pred_check
      _
    $region23: #{tpu_custom_call.1} parent=1 // pred_check_branch
      %24 = sbr.rel (0) target = $region25
    $region24: #{tpu_custom_call.1} parent=1 // pred_region
      _
    $region25: #{tpu_custom_call.1} parent=1 // pred_fallthru
      _
    // Predicated region
    $region26: #{tpu_custom_call.1} parent=1 // pred_check
      _
    $region27: #{tpu_custom_call.1} parent=1 // pred_check_branch
      %26 = sbr.rel (0) target = $region29
    $region28: #{tpu_custom_call.1} parent=1 // pred_region
      _
    $region29: #{tpu_custom_call.1} parent=1 // pred_fallthru
      _
    %v28 = vld [vmem:[%s0] sm:$0xff]
    %v29 = vld [vmem:[%s0 + $0x8] sm:$0xff]
    %v30 = vld [vmem:[%s0 + $0x10] sm:$0xff]
    %v31 = vld [vmem:[%s0 + $0x18] sm:$0xff]
    %v32 = vld [vmem:[%s1] sm:$0xff]
    %v33 = vld [vmem:[%s1 + $0x8] sm:$0xff]
    %v34 = vld [vmem:[%s1 + $0x10] sm:$0xff]
    %v35 = vld [vmem:[%s1 + $0x18] sm:$0xff]
    %v36 = vld [vmem:[%s2] sm:$0xff]
    %v37 = vld [vmem:[%s2 + $0x8] sm:$0xff]
    %v38 = vld [vmem:[%s2 + $0x10] sm:$0xff]
    %v39 = vld [vmem:[%s2 + $0x18] sm:$0xff]
    %v40 = vld [vmem:[%s3] sm:$0xff]
    %v41 = vld [vmem:[%s3 + $0x8] sm:$0xff]
    %v42 = vld [vmem:[%s3 + $0x10] sm:$0xff]
    %v43 = vld [vmem:[%s3 + $0x18] sm:$0xff]
    %45 = vset.pattern.permute.xlu0 0
    %46 = vperm.xlu0 %45, %v40
    %v47 = vpop.permute.xlu0 %46
    %50 = vset.pattern.permute.xlu0 0
    %51 = vperm.xlu0 %50, %v41
    %v52 = vpop.permute.xlu0 %51
    %55 = vset.pattern.permute.xlu0 0
    %56 = vperm.xlu0 %55, %v42
    %v57 = vpop.permute.xlu0 %56
    %60 = vset.pattern.permute.xlu0 0
    %61 = vperm.xlu0 %60, %v43
    %v62 = vpop.permute.xlu0 %61
    %64 = vset.pattern.permute.xlu0 1
    %65 = vperm.xlu0 %64, %v40
    %v66 = vpop.permute.xlu0 %65
    %68 = vset.pattern.permute.xlu0 1
    %69 = vperm.xlu0 %68, %v41
    %v70 = vpop.permute.xlu0 %69
    %72 = vset.pattern.permute.xlu0 1
    %73 = vperm.xlu0 %72, %v42
    %v74 = vpop.permute.xlu0 %73
    %76 = vset.pattern.permute.xlu0 1
    %77 = vperm.xlu0 %76, %v43
    %v78 = vpop.permute.xlu0 %77
    %80 = vset.pattern.permute.xlu0 2
    %81 = vperm.xlu0 %80, %v40
    %v82 = vpop.permute.xlu0 %81
    %84 = vset.pattern.permute.xlu0 2
    %85 = vperm.xlu0 %84, %v41
    %v86 = vpop.permute.xlu0 %85
    %88 = vset.pattern.permute.xlu0 2
    %89 = vperm.xlu0 %88, %v42
    %v90 = vpop.permute.xlu0 %89
    %92 = vset.pattern.permute.xlu0 2
    %93 = vperm.xlu0 %92, %v43
    %v94 = vpop.permute.xlu0 %93
    %96 = vset.pattern.permute.xlu0 3
    %97 = vperm.xlu0 %96, %v40
    %v98 = vpop.permute.xlu0 %97
    %100 = vset.pattern.permute.xlu0 3
    %101 = vperm.xlu0 %100, %v41
    %v102 = vpop.permute.xlu0 %101
    %104 = vset.pattern.permute.xlu0 3
    %105 = vperm.xlu0 %104, %v42
    %v106 = vpop.permute.xlu0 %105
    %108 = vset.pattern.permute.xlu0 3
    %109 = vperm.xlu0 %108, %v43
    %v110 = vpop.permute.xlu0 %109
    %112 = vset.pattern.permute.xlu0 4
    %113 = vperm.xlu0 %112, %v40
    %v114 = vpop.permute.xlu0 %113
    %116 = vset.pattern.permute.xlu0 4
    %117 = vperm.xlu0 %116, %v41
    %v118 = vpop.permute.xlu0 %117
    %120 = vset.pattern.permute.xlu0 4
    %121 = vperm.xlu0 %120, %v42
    %v122 = vpop.permute.xlu0 %121
    %124 = vset.pattern.permute.xlu0 4
    %125 = vperm.xlu0 %124, %v43
    %v126 = vpop.permute.xlu0 %125
    %128 = vset.pattern.permute.xlu0 5
    %129 = vperm.xlu0 %128, %v40
    %v130 = vpop.permute.xlu0 %129
    %132 = vset.pattern.permute.xlu0 5
    %133 = vperm.xlu0 %132, %v41
    %v134 = vpop.permute.xlu0 %133
    %136 = vset.pattern.permute.xlu0 5
    %137 = vperm.xlu0 %136, %v42
    %v138 = vpop.permute.xlu0 %137
    %140 = vset.pattern.permute.xlu0 5
    %141 = vperm.xlu0 %140, %v43
    %v142 = vpop.permute.xlu0 %141
    %144 = vset.pattern.permute.xlu0 6
    %145 = vperm.xlu0 %144, %v40
    %v146 = vpop.permute.xlu0 %145
    %148 = vset.pattern.permute.xlu0 6
    %149 = vperm.xlu0 %148, %v41
    %v150 = vpop.permute.xlu0 %149
    %152 = vset.pattern.permute.xlu0 6
    %153 = vperm.xlu0 %152, %v42
    %v154 = vpop.permute.xlu0 %153
    %156 = vset.pattern.permute.xlu0 6
    %157 = vperm.xlu0 %156, %v43
    %v158 = vpop.permute.xlu0 %157
    %160 = vset.pattern.permute.xlu0 7
    %161 = vperm.xlu0 %160, %v40
    %v162 = vpop.permute.xlu0 %161
    %164 = vset.pattern.permute.xlu0 7
    %165 = vperm.xlu0 %164, %v41
    %v166 = vpop.permute.xlu0 %165
    %168 = vset.pattern.permute.xlu0 7
    %169 = vperm.xlu0 %168, %v42
    %v170 = vpop.permute.xlu0 %169
    %172 = vset.pattern.permute.xlu0 7
    %173 = vperm.xlu0 %172, %v43
    %v174 = vpop.permute.xlu0 %173
    %vm176 = vcmask 261120
    %v178 = vsel %vm176, %v36, 0
    %v181 = vsel %vm176, %v37, 0
    %v184 = vsel %vm176, %v38, 0
    %v187 = vsel %vm176, %v39, 0
    %189 = vmatprep.subr.mxu0 0.0
    %190 = vmatpush1.msra.mxu0 %v28
    %191 = vmatprep.subr.mxu0 0.0
    %192 = vmatpush1.msra.mxu0 %v29
    %193 = vmatprep.subr.mxu0 0.0
    %194 = vmatpush1.msra.mxu0 %v30
    %195 = vmatprep.subr.mxu0 0.0
    %196 = vmatpush1.msra.mxu0 %v31
    %197 = vmatprep.subr.mxu0 0.0
    %198 = vmatpush1.msra.mxu0 0.0
    %199 = vmatprep.subr.mxu0 0.0
    %200 = vmatpush1.msra.mxu0 0.0
    %201 = vmatprep.subr.mxu0 0.0
    %202 = vmatpush1.msra.mxu0 0.0
    %203 = vmatprep.subr.mxu0 0.0
    %204 = vmatpush1.msra.mxu0 0.0
    %205 = vmatprep.subr.mxu0 0.0
    %206 = vmatpush1.msra.mxu0 0.0
    %207 = vmatprep.subr.mxu0 0.0
    %208 = vmatpush1.msra.mxu0 0.0
    %209 = vmatprep.subr.mxu0 0.0
    %210 = vmatpush1.msra.mxu0 0.0
    %211 = vmatprep.subr.mxu0 0.0
    %212 = vmatpush1.msra.mxu0 0.0
    %213 = vmatprep.subr.mxu0 0.0
    %214 = vmatpush1.msra.mxu0 0.0
    %215 = vmatprep.subr.mxu0 0.0
    %216 = vmatpush1.msra.mxu0 0.0
    %217 = vmatprep.subr.mxu0 0.0
    %218 = vmatpush1.msra.mxu0 0.0
    %219 = vmatprep.subr.mxu0 0.0
    %220 = vmatpush1.msra.mxu0 0.0
    %221 = vmatprep.subr.mxu0 0.0
    %222 = vmatpush1.msra.mxu0 0.0
    %223 = vmatprep.subr.mxu0 0.0
    %224 = vmatpush1.msra.mxu0 0.0
    %225 = vmatprep.subr.mxu0 0.0
    %226 = vmatpush1.msra.mxu0 0.0
    %227 = vmatprep.subr.mxu0 0.0
    %228 = vmatpush1.msra.mxu0 0.0
    %229 = vmatprep.subr.mxu0 0.0
    %230 = vmatpush1.msra.mxu0 0.0
    %231 = vmatprep.subr.mxu0 0.0
    %232 = vmatpush1.msra.mxu0 0.0
    %233 = vmatprep.subr.mxu0 0.0
    %234 = vmatpush1.msra.mxu0 0.0
    %235 = vmatprep.subr.mxu0 0.0
    %236 = vmatpush1.msra.mxu0 0.0
    %237 = vmatprep.subr.mxu0 0.0
    %238 = vmatpush1.msra.mxu0 0.0
    %239 = vmatprep.subr.mxu0 0.0
    %240 = vmatpush1.msra.mxu0 0.0
    %241 = vmatprep.subr.mxu0 0.0
    %242 = vmatpush1.msra.mxu0 0.0
    %243 = vmatprep.subr.mxu0 0.0
    %244 = vmatpush1.msra.mxu0 0.0
    %245 = vmatprep.subr.mxu0 0.0
    %246 = vmatpush1.msra.mxu0 0.0
    %247 = vmatprep.subr.mxu0 0.0
    %248 = vmatpush1.msra.mxu0 0.0
    %249 = vmatprep.subr.mxu0 0.0
    %250 = vmatpush1.msra.mxu0 0.0
    %251 = vmatprep.subr.mxu0 0.0
    %252 = vmatpush1.msra.mxu0 0.0
    %253 = vmatprep.mubr.f32.mxu0 0.0
    %254 = vmatmul.mubr.f32.gmra.mrb[0].mxu0 %v178
    %v255 = vpop.f32.mrb[0].mxu0
    %v256 = vadd.f32 0.0, %v255
    %v257 = vpop.f32.mrb[0].mxu0
    %258 = vmatprep.mubr.f32.mxu0 0.0
    %259 = vmatmul.mubr.f32.gmra.mrb[0].mxu0 %v181
    %v260 = vpop.f32.mrb[0].mxu0
    %v261 = vadd.f32 0.0, %v260
    %v262 = vpop.f32.mrb[0].mxu0
    %263 = vmatprep.mubr.f32.mxu0 0.0
    %264 = vmatmul.mubr.f32.gmra.mrb[0].mxu0 %v184
    %v265 = vpop.f32.mrb[0].mxu0
    %v266 = vadd.f32 0.0, %v265
    %v267 = vpop.f32.mrb[0].mxu0
    %268 = vmatprep.mubr.f32.mxu0 0.0
    %269 = vmatmul.mubr.f32.gmra.mrb[0].mxu0 %v187
    %v270 = vpop.f32.mrb[0].mxu0
    %v271 = vadd.f32 0.0, %v270
    %v272 = vpop.f32.mrb[0].mxu0
    %273 = vdwg.mxu0
    %274 = vmatprep.subr.mxu0 0.0
    %275 = vmatpush1.msra.mxu0 %v256
    %276 = vmatprep.subr.mxu0 0.0
    %277 = vmatpush1.msra.mxu0 %v261
    %278 = vmatprep.subr.mxu0 0.0
    %279 = vmatpush1.msra.mxu0 %v266
    %280 = vmatprep.subr.mxu0 0.0
    %281 = vmatpush1.msra.mxu0 %v271
    %282 = vmatprep.subr.mxu0 0.0
    %283 = vmatpush1.msra.mxu0 0.0
    %284 = vmatprep.subr.mxu0 0.0
    %285 = vmatpush1.msra.mxu0 0.0
    %286 = vmatprep.subr.mxu0 0.0
    %287 = vmatpush1.msra.mxu0 0.0
    %288 = vmatprep.subr.mxu0 0.0
    %289 = vmatpush1.msra.mxu0 0.0
    %290 = vmatprep.subr.mxu0 0.0
    %291 = vmatpush1.msra.mxu0 0.0
    %292 = vmatprep.subr.mxu0 0.0
    %293 = vmatpush1.msra.mxu0 0.0
    %294 = vmatprep.subr.mxu0 0.0
    %295 = vmatpush1.msra.mxu0 0.0
    %296 = vmatprep.subr.mxu0 0.0
    %297 = vmatpush1.msra.mxu0 0.0
    %298 = vmatprep.subr.mxu0 0.0
    %299 = vmatpush1.msra.mxu0 0.0
    %300 = vmatprep.subr.mxu0 0.0
    %301 = vmatpush1.msra.mxu0 0.0
    %302 = vmatprep.subr.mxu0 0.0
    %303 = vmatpush1.msra.mxu0 0.0
    %304 = vmatprep.subr.mxu0 0.0
    %305 = vmatpush1.msra.mxu0 0.0
    %306 = vmatprep.subr.mxu0 0.0
    %307 = vmatpush1.msra.mxu0 0.0
    %308 = vmatprep.subr.mxu0 0.0
    %309 = vmatpush1.msra.mxu0 0.0
    %310 = vmatprep.subr.mxu0 0.0
    %311 = vmatpush1.msra.mxu0 0.0
    %312 = vmatprep.subr.mxu0 0.0
    %313 = vmatpush1.msra.mxu0 0.0
    %314 = vmatprep.subr.mxu0 0.0
    %315 = vmatpush1.msra.mxu0 0.0
    %316 = vmatprep.subr.mxu0 0.0
    %317 = vmatpush1.msra.mxu0 0.0
    %318 = vmatprep.subr.mxu0 0.0
    %319 = vmatpush1.msra.mxu0 0.0
    %320 = vmatprep.subr.mxu0 0.0
    %321 = vmatpush1.msra.mxu0 0.0
    %322 = vmatprep.subr.mxu0 0.0
    %323 = vmatpush1.msra.mxu0 0.0
    %324 = vmatprep.subr.mxu0 0.0
    %325 = vmatpush1.msra.mxu0 0.0
    %326 = vmatprep.subr.mxu0 0.0
    %327 = vmatpush1.msra.mxu0 0.0
    %328 = vmatprep.subr.mxu0 0.0
    %329 = vmatpush1.msra.mxu0 0.0
    %330 = vmatprep.subr.mxu0 0.0
    %331 = vmatpush1.msra.mxu0 0.0
    %332 = vmatprep.subr.mxu0 0.0
    %333 = vmatpush1.msra.mxu0 0.0
    %334 = vmatprep.subr.mxu0 0.0
    %335 = vmatpush1.msra.mxu0 0.0
    %336 = vmatprep.subr.mxu0 0.0
    %337 = vmatpush1.msra.mxu0 0.0
    %338 = vmatprep.mubr.f32.mxu0 0.0
    %339 = vmatmul.mubr.f32.gmra.mrb[0].mxu0 %v178
    %v340 = vpop.f32.mrb[0].mxu0
    %v341 = vadd.f32 0.0, %v340
    %v342 = vpop.f32.mrb[0].mxu0
    %343 = vmatprep.mubr.f32.mxu0 0.0
    %344 = vmatmul.mubr.f32.gmra.mrb[0].mxu0 %v181
    %v345 = vpop.f32.mrb[0].mxu0
    %v346 = vadd.f32 0.0, %v345
    %v347 = vpop.f32.mrb[0].mxu0
    %348 = vmatprep.mubr.f32.mxu0 0.0
    %349 = vmatmul.mubr.f32.gmra.mrb[0].mxu0 %v184
    %v350 = vpop.f32.mrb[0].mxu0
    %v351 = vadd.f32 0.0, %v350
    %v352 = vpop.f32.mrb[0].mxu0
    %353 = vmatprep.mubr.f32.mxu0 0.0
    %354 = vmatmul.mubr.f32.gmra.mrb[0].mxu0 %v187
    %v355 = vpop.f32.mrb[0].mxu0
    %v356 = vadd.f32 0.0, %v355
    %v357 = vpop.f32.mrb[0].mxu0
    %358 = vdwg.mxu0
    %v359 = vmul.f32 %v341, 2.0
    %v360 = vmul.f32 %v346, 2.0
    %v361 = vmul.f32 %v351, 2.0
    %v362 = vmul.f32 %v356, 2.0
    %v363 = vsub.f32 %v359, %v28
    %v364 = vsub.f32 %v360, %v29
    %v365 = vsub.f32 %v361, %v30
    %v366 = vsub.f32 %v362, %v31
    %371 = vrot.lane.b32.xlu0 %v256, 4
    %v372 = vpop.permute.xlu0 %371
    %373 = vrot.lane.b32.xlu0 %v261, 4
    %v374 = vpop.permute.xlu0 %373
    %375 = vrot.lane.b32.xlu0 %v266, 4
    %v376 = vpop.permute.xlu0 %375
    %377 = vrot.lane.b32.xlu0 %v271, 4
    %v378 = vpop.permute.xlu0 %377
    %387 = vrot.lane.b32.xlu0 %v363, 8
    %v388 = vpop.permute.xlu0 %387
    %389 = vrot.lane.b32.xlu0 %v364, 8
    %v390 = vpop.permute.xlu0 %389
    %391 = vrot.lane.b32.xlu0 %v365, 8
    %v392 = vpop.permute.xlu0 %391
    %393 = vrot.lane.b32.xlu0 %v366, 8
    %v394 = vpop.permute.xlu0 %393
    %vm399 = vcmask 31744
    %v400 = vsel %vm399, %v28, %v372
    %v401 = vsel %vm399, %v29, %v374
    %v402 = vsel %vm399, %v30, %v376
    %v403 = vsel %vm399, %v31, %v378
    %vm404 = vcmask 64512
    %v405 = vsel %vm404, %v400, %v388
    %v406 = vsel %vm404, %v401, %v390
    %v407 = vsel %vm404, %v402, %v392
    %v408 = vsel %vm404, %v403, %v394
    %v409 = vmul.f32 %v47, %v405
    %v410 = vmul.f32 %v52, %v406
    %v411 = vmul.f32 %v57, %v407
    %v412 = vmul.f32 %v62, %v408
    %v413 = vmul.f32 %v66, %v405
    %v414 = vmul.f32 %v70, %v406
    %v415 = vmul.f32 %v74, %v407
    %v416 = vmul.f32 %v78, %v408
    %v417 = vmul.f32 %v82, %v405
    %v418 = vmul.f32 %v86, %v406
    %v419 = vmul.f32 %v90, %v407
    %v420 = vmul.f32 %v94, %v408
    %v421 = vmul.f32 %v98, %v405
    %v422 = vmul.f32 %v102, %v406
    %v423 = vmul.f32 %v106, %v407
    %v424 = vmul.f32 %v110, %v408
    %v425 = vmul.f32 %v114, %v405
    %v426 = vmul.f32 %v118, %v406
    %v427 = vmul.f32 %v122, %v407
    %v428 = vmul.f32 %v126, %v408
    %v429 = vmul.f32 %v130, %v405
    %v430 = vmul.f32 %v134, %v406
    %v431 = vmul.f32 %v138, %v407
    %v432 = vmul.f32 %v142, %v408
    %v433 = vmul.f32 %v146, %v405
    %v434 = vmul.f32 %v150, %v406
    %v435 = vmul.f32 %v154, %v407
    %v436 = vmul.f32 %v158, %v408
    %v437 = vmul.f32 %v162, %v405
    %v438 = vmul.f32 %v166, %v406
    %v439 = vmul.f32 %v170, %v407
    %v440 = vmul.f32 %v174, %v408
    %445 = vrot.lane.b32.xlu0 %v413, 12
    %v446 = vpop.permute.xlu0 %445
    %447 = vrot.lane.b32.xlu0 %v414, 12
    %v448 = vpop.permute.xlu0 %447
    %449 = vrot.lane.b32.xlu0 %v415, 12
    %v450 = vpop.permute.xlu0 %449
    %451 = vrot.lane.b32.xlu0 %v416, 12
    %v452 = vpop.permute.xlu0 %451
    %461 = vrot.lane.b32.xlu0 %v417, 24
    %v462 = vpop.permute.xlu0 %461
    %463 = vrot.lane.b32.xlu0 %v418, 24
    %v464 = vpop.permute.xlu0 %463
    %465 = vrot.lane.b32.xlu0 %v419, 24
    %v466 = vpop.permute.xlu0 %465
    %467 = vrot.lane.b32.xlu0 %v420, 24
    %v468 = vpop.permute.xlu0 %467
    %477 = vrot.lane.b32.xlu0 %v421, 36
    %v478 = vpop.permute.xlu0 %477
    %479 = vrot.lane.b32.xlu0 %v422, 36
    %v480 = vpop.permute.xlu0 %479
    %481 = vrot.lane.b32.xlu0 %v423, 36
    %v482 = vpop.permute.xlu0 %481
    %483 = vrot.lane.b32.xlu0 %v424, 36
    %v484 = vpop.permute.xlu0 %483
    %493 = vrot.lane.b32.xlu0 %v425, 48
    %v494 = vpop.permute.xlu0 %493
    %495 = vrot.lane.b32.xlu0 %v426, 48
    %v496 = vpop.permute.xlu0 %495
    %497 = vrot.lane.b32.xlu0 %v427, 48
    %v498 = vpop.permute.xlu0 %497
    %499 = vrot.lane.b32.xlu0 %v428, 48
    %v500 = vpop.permute.xlu0 %499
    %509 = vrot.lane.b32.xlu0 %v429, 60
    %v510 = vpop.permute.xlu0 %509
    %511 = vrot.lane.b32.xlu0 %v430, 60
    %v512 = vpop.permute.xlu0 %511
    %513 = vrot.lane.b32.xlu0 %v431, 60
    %v514 = vpop.permute.xlu0 %513
    %515 = vrot.lane.b32.xlu0 %v432, 60
    %v516 = vpop.permute.xlu0 %515
    %525 = vrot.lane.b32.xlu0 %v433, 72
    %v526 = vpop.permute.xlu0 %525
    %527 = vrot.lane.b32.xlu0 %v434, 72
    %v528 = vpop.permute.xlu0 %527
    %529 = vrot.lane.b32.xlu0 %v435, 72
    %v530 = vpop.permute.xlu0 %529
    %531 = vrot.lane.b32.xlu0 %v436, 72
    %v532 = vpop.permute.xlu0 %531
    %541 = vrot.lane.b32.xlu0 %v437, 84
    %v542 = vpop.permute.xlu0 %541
    %543 = vrot.lane.b32.xlu0 %v438, 84
    %v544 = vpop.permute.xlu0 %543
    %545 = vrot.lane.b32.xlu0 %v439, 84
    %v546 = vpop.permute.xlu0 %545
    %547 = vrot.lane.b32.xlu0 %v440, 84
    %v548 = vpop.permute.xlu0 %547
    %553 = vrot.lane.b32.xlu0 %v40, 96
    %v554 = vpop.permute.xlu0 %553
    %555 = vrot.lane.b32.xlu0 %v41, 96
    %v556 = vpop.permute.xlu0 %555
    %557 = vrot.lane.b32.xlu0 %v42, 96
    %v558 = vpop.permute.xlu0 %557
    %559 = vrot.lane.b32.xlu0 %v43, 96
    %v560 = vpop.permute.xlu0 %559
    %vm565 = vcmask 97280
    %v566 = vsel %vm565, %v409, %v446
    %v567 = vsel %vm565, %v410, %v448
    %v568 = vsel %vm565, %v411, %v450
    %v569 = vsel %vm565, %v412, %v452
    %vm570 = vcmask 195584
    %v571 = vsel %vm570, %v566, %v462
    %v572 = vsel %vm570, %v567, %v464
    %v573 = vsel %vm570, %v568, %v466
    %v574 = vsel %vm570, %v569, %v468
    %vm575 = vcmask 293888
    %v576 = vsel %vm575, %v571, %v478
    %v577 = vsel %vm575, %v572, %v480
    %v578 = vsel %vm575, %v573, %v482
    %v579 = vsel %vm575, %v574, %v484
    %vm580 = vcmask 392192
    %v581 = vsel %vm580, %v576, %v494
    %v582 = vsel %vm580, %v577, %v496
    %v583 = vsel %vm580, %v578, %v498
    %v584 = vsel %vm580, %v579, %v500
    %vm585 = vcmask 490496
    %v586 = vsel %vm585, %v581, %v510
    %v587 = vsel %vm585, %v582, %v512
    %v588 = vsel %vm585, %v583, %v514
    %v589 = vsel %vm585, %v584, %v516
    %vm590 = vcmask 588800
    %v591 = vsel %vm590, %v586, %v526
    %v592 = vsel %vm590, %v587, %v528
    %v593 = vsel %vm590, %v588, %v530
    %v594 = vsel %vm590, %v589, %v532
    %vm595 = vcmask 687104
    %v596 = vsel %vm595, %v591, %v542
    %v597 = vsel %vm595, %v592, %v544
    %v598 = vsel %vm595, %v593, %v546
    %v599 = vsel %vm595, %v594, %v548
    %vm600 = vcmask 785408
    %v601 = vsel %vm600, %v596, %v554
    %v602 = vsel %vm600, %v597, %v556
    %v603 = vsel %vm600, %v598, %v558
    %v604 = vsel %vm600, %v599, %v560
    %v605 = vld [vmem:[%s4] sm:$0xf]
    %v606 = vld [vmem:[%s4 + $0x4] sm:$0xf]
    %v607 = vld [vmem:[%s4 + $0x8] sm:$0xf]
    %v608 = vld [vmem:[%s4 + $0xc] sm:$0xf]
    %v609 = vld [vmem:[%s4 + $0x10] sm:$0xf]
    %v610 = vld [vmem:[%s4 + $0x14] sm:$0xf]
    %v611 = vld [vmem:[%s4 + $0x18] sm:$0xf]
    %v612 = vld [vmem:[%s4 + $0x1c] sm:$0xf]
    %v613 = vld [vmem:[%s4 + $0x20] sm:$0xf]
    %v614 = vld [vmem:[%s4 + $0x24] sm:$0xf]
    %v615 = vld [vmem:[%s4 + $0x28] sm:$0xf]
    %v616 = vld [vmem:[%s4 + $0x2c] sm:$0xf]
    %v617 = vld [vmem:[%s4 + $0x30] sm:$0xf]
    %v618 = vpack.c.bf16 %v602, %v601
    %v619 = vpack.c.bf16 %v604, %v603
    %v633 = vunpack.c.l.b16 %v605
    %v634 = vunpack.c.l.b16 %v606
    %v635 = vunpack.c.l.b16 %v607
    %v636 = vunpack.c.l.b16 %v608
    %v637 = vunpack.c.l.b16 %v609
    %v638 = vunpack.c.l.b16 %v610
    %v639 = vunpack.c.l.b16 %v611
    %v640 = vunpack.c.l.b16 %v612
    %v641 = vunpack.c.l.b16 %v613
    %v642 = vunpack.c.l.b16 %v614
    %v643 = vunpack.c.l.b16 %v615
    %v644 = vunpack.c.l.b16 %v616
    %v645 = vunpack.c.l.b16 %v617
    %v646 = vpack.c.b16 %v634, %v633
    %v647 = vpack.c.b16 %v636, %v635
    %v648 = vpack.c.b16 %v638, %v637
    %v649 = vpack.c.b16 %v640, %v639
    %v650 = vpack.c.b16 %v642, %v641
    %v651 = vpack.c.b16 %v644, %v643
    %v652 = vpack.c.b16 %v645, %v645
    %vm659 = vcmask 850944
    %v661 = vsel %vm659, %v618, 0
    %v664 = vsel %vm659, %v619, 0
    %vm666 = vcmask 1043456
    %v668 = vsel %vm666, %v652, 0
    %670 = vmatprep.subr.bf16.mxu0 0
    %671 = vmatpush1.bf16.msra.mxu0 %v646
    %672 = vmatprep.subr.bf16.mxu0 0
    %673 = vmatpush1.bf16.msra.mxu0 %v647
    %674 = vmatprep.subr.bf16.mxu0 0
    %675 = vmatpush1.bf16.msra.mxu0 %v648
    %676 = vmatprep.subr.bf16.mxu0 0
    %677 = vmatpush1.bf16.msra.mxu0 %v649
    %678 = vmatprep.subr.bf16.mxu0 0
    %679 = vmatpush1.bf16.msra.mxu0 %v650
    %680 = vmatprep.subr.bf16.mxu0 0
    %681 = vmatpush1.bf16.msra.mxu0 %v651
    %682 = vmatprep.subr.bf16.mxu0 0
    %683 = vmatpush1.bf16.msra.mxu0 %v668
    %684 = vmatprep.subr.bf16.mxu0 0
    %685 = vmatpush1.bf16.msra.mxu0 0
    %686 = vmatprep.subr.bf16.mxu0 0
    %687 = vmatpush1.bf16.msra.mxu0 0
    %688 = vmatprep.subr.bf16.mxu0 0
    %689 = vmatpush1.bf16.msra.mxu0 0
    %690 = vmatprep.subr.bf16.mxu0 0
    %691 = vmatpush1.bf16.msra.mxu0 0
    %692 = vmatprep.subr.bf16.mxu0 0
    %693 = vmatpush1.bf16.msra.mxu0 0
    %694 = vmatprep.subr.bf16.mxu0 0
    %695 = vmatpush1.bf16.msra.mxu0 0
    %696 = vmatprep.subr.bf16.mxu0 0
    %697 = vmatpush1.bf16.msra.mxu0 0
    %698 = vmatprep.subr.bf16.mxu0 0
    %699 = vmatpush1.bf16.msra.mxu0 0
    %700 = vmatprep.subr.bf16.mxu0 0
    %701 = vmatpush1.bf16.msra.mxu0 0
    %702 = vmatprep.mubr.bf16.mxu0 0
    %703 = vmatmul.mubr.bf16.gmra.mrb[0].mxu0 %v661
    %v704 = vpop.f32.mrb[0].mxu0
    %v705 = vadd.f32 0.0, %v704
    %v706 = vpop.f32.mrb[0].mxu0
    %v707 = vpop.f32.mrb[0].mxu0
    %v708 = vadd.f32 0.0, %v707
    %v709 = vpop.f32.mrb[0].mxu0
    %710 = vmatprep.mubr.bf16.mxu0 0
    %711 = vmatmul.mubr.bf16.gmra.mrb[0].mxu0 %v664
    %v712 = vpop.f32.mrb[0].mxu0
    %v713 = vadd.f32 0.0, %v712
    %v714 = vpop.f32.mrb[0].mxu0
    %v715 = vpop.f32.mrb[0].mxu0
    %v716 = vadd.f32 0.0, %v715
    %v717 = vpop.f32.mrb[0].mxu0
    %718 = vdwg.mxu0
    %719 = vmatprep.subr.mxu0 0.0
    %720 = vmatpush1.msra.mxu0 %v32
    %721 = vmatprep.subr.mxu0 0.0
    %722 = vmatpush1.msra.mxu0 %v33
    %723 = vmatprep.subr.mxu0 0.0
    %724 = vmatpush1.msra.mxu0 %v34
    %725 = vmatprep.subr.mxu0 0.0
    %726 = vmatpush1.msra.mxu0 %v35
    %727 = vmatprep.subr.mxu0 0.0
    %728 = vmatpush1.msra.mxu0 0.0
    %729 = vmatprep.subr.mxu0 0.0
    %730 = vmatpush1.msra.mxu0 0.0
    %731 = vmatprep.subr.mxu0 0.0
    %732 = vmatpush1.msra.mxu0 0.0
    %733 = vmatprep.subr.mxu0 0.0
    %734 = vmatpush1.msra.mxu0 0.0
    %735 = vmatprep.subr.mxu0 0.0
    %736 = vmatpush1.msra.mxu0 0.0
    %737 = vmatprep.subr.mxu0 0.0
    %738 = vmatpush1.msra.mxu0 0.0
    %739 = vmatprep.subr.mxu0 0.0
    %740 = vmatpush1.msra.mxu0 0.0
    %741 = vmatprep.subr.mxu0 0.0
    %742 = vmatpush1.msra.mxu0 0.0
    %743 = vmatprep.subr.mxu0 0.0
    %744 = vmatpush1.msra.mxu0 0.0
    %745 = vmatprep.subr.mxu0 0.0
    %746 = vmatpush1.msra.mxu0 0.0
    %747 = vmatprep.subr.mxu0 0.0
    %748 = vmatpush1.msra.mxu0 0.0
    %749 = vmatprep.subr.mxu0 0.0
    %750 = vmatpush1.msra.mxu0 0.0
    %751 = vmatprep.subr.mxu0 0.0
    %752 = vmatpush1.msra.mxu0 0.0
    %753 = vmatprep.subr.mxu0 0.0
    %754 = vmatpush1.msra.mxu0 0.0
    %755 = vmatprep.subr.mxu0 0.0
    %756 = vmatpush1.msra.mxu0 0.0
    %757 = vmatprep.subr.mxu0 0.0
    %758 = vmatpush1.msra.mxu0 0.0
    %759 = vmatprep.subr.mxu0 0.0
    %760 = vmatpush1.msra.mxu0 0.0
    %761 = vmatprep.subr.mxu0 0.0
    %762 = vmatpush1.msra.mxu0 0.0
    %763 = vmatprep.subr.mxu0 0.0
    %764 = vmatpush1.msra.mxu0 0.0
    %765 = vmatprep.subr.mxu0 0.0
    %766 = vmatpush1.msra.mxu0 0.0
    %767 = vmatprep.subr.mxu0 0.0
    %768 = vmatpush1.msra.mxu0 0.0
    %769 = vmatprep.subr.mxu0 0.0
    %770 = vmatpush1.msra.mxu0 0.0
    %771 = vmatprep.subr.mxu0 0.0
    %772 = vmatpush1.msra.mxu0 0.0
    %773 = vmatprep.subr.mxu0 0.0
    %774 = vmatpush1.msra.mxu0 0.0
    %775 = vmatprep.subr.mxu0 0.0
    %776 = vmatpush1.msra.mxu0 0.0
    %777 = vmatprep.subr.mxu0 0.0
    %778 = vmatpush1.msra.mxu0 0.0
    %779 = vmatprep.subr.mxu0 0.0
    %780 = vmatpush1.msra.mxu0 0.0
    %781 = vmatprep.subr.mxu0 0.0
    %782 = vmatpush1.msra.mxu0 0.0
    %783 = vmatprep.mubr.f32.mxu0 0.0
    %784 = vmatmul.mubr.f32.gmra.mrb[0].mxu0 %v178
    %v785 = vpop.f32.mrb[0].mxu0
    %v786 = vadd.f32 0.0, %v785
    %v787 = vpop.f32.mrb[0].mxu0
    %788 = vmatprep.mubr.f32.mxu0 0.0
    %789 = vmatmul.mubr.f32.gmra.mrb[0].mxu0 %v181
    %v790 = vpop.f32.mrb[0].mxu0
    %v791 = vadd.f32 0.0, %v790
    %v792 = vpop.f32.mrb[0].mxu0
    %793 = vmatprep.mubr.f32.mxu0 0.0
    %794 = vmatmul.mubr.f32.gmra.mrb[0].mxu0 %v184
    %v795 = vpop.f32.mrb[0].mxu0
    %v796 = vadd.f32 0.0, %v795
    %v797 = vpop.f32.mrb[0].mxu0
    %798 = vmatprep.mubr.f32.mxu0 0.0
    %799 = vmatmul.mubr.f32.gmra.mrb[0].mxu0 %v187
    %v800 = vpop.f32.mrb[0].mxu0
    %v801 = vadd.f32 0.0, %v800
    %v802 = vpop.f32.mrb[0].mxu0
    %803 = vdwg.mxu0
    %804 = vmatprep.subr.mxu0 0.0
    %805 = vmatpush1.msra.mxu0 %v786
    %806 = vmatprep.subr.mxu0 0.0
    %807 = vmatpush1.msra.mxu0 %v791
    %808 = vmatprep.subr.mxu0 0.0
    %809 = vmatpush1.msra.mxu0 %v796
    %810 = vmatprep.subr.mxu0 0.0
    %811 = vmatpush1.msra.mxu0 %v801
    %812 = vmatprep.subr.mxu0 0.0
    %813 = vmatpush1.msra.mxu0 0.0
    %814 = vmatprep.subr.mxu0 0.0
    %815 = vmatpush1.msra.mxu0 0.0
    %816 = vmatprep.subr.mxu0 0.0
    %817 = vmatpush1.msra.mxu0 0.0
    %818 = vmatprep.subr.mxu0 0.0
    %819 = vmatpush1.msra.mxu0 0.0
    %820 = vmatprep.subr.mxu0 0.0
    %821 = vmatpush1.msra.mxu0 0.0
    %822 = vmatprep.subr.mxu0 0.0
    %823 = vmatpush1.msra.mxu0 0.0
    %824 = vmatprep.subr.mxu0 0.0
    %825 = vmatpush1.msra.mxu0 0.0
    %826 = vmatprep.subr.mxu0 0.0
    %827 = vmatpush1.msra.mxu0 0.0
    %828 = vmatprep.subr.mxu0 0.0
    %829 = vmatpush1.msra.mxu0 0.0
    %830 = vmatprep.subr.mxu0 0.0
    %831 = vmatpush1.msra.mxu0 0.0
    %832 = vmatprep.subr.mxu0 0.0
    %833 = vmatpush1.msra.mxu0 0.0
    %834 = vmatprep.subr.mxu0 0.0
    %835 = vmatpush1.msra.mxu0 0.0
    %836 = vmatprep.subr.mxu0 0.0
    %837 = vmatpush1.msra.mxu0 0.0
    %838 = vmatprep.subr.mxu0 0.0
    %839 = vmatpush1.msra.mxu0 0.0
    %840 = vmatprep.subr.mxu0 0.0
    %841 = vmatpush1.msra.mxu0 0.0
    %842 = vmatprep.subr.mxu0 0.0
    %843 = vmatpush1.msra.mxu0 0.0
    %844 = vmatprep.subr.mxu0 0.0
    %845 = vmatpush1.msra.mxu0 0.0
    %846 = vmatprep.subr.mxu0 0.0
    %847 = vmatpush1.msra.mxu0 0.0
    %848 = vmatprep.subr.mxu0 0.0
    %849 = vmatpush1.msra.mxu0 0.0
    %850 = vmatprep.subr.mxu0 0.0
    %851 = vmatpush1.msra.mxu0 0.0
    %852 = vmatprep.subr.mxu0 0.0
    %853 = vmatpush1.msra.mxu0 0.0
    %854 = vmatprep.subr.mxu0 0.0
    %855 = vmatpush1.msra.mxu0 0.0
    %856 = vmatprep.subr.mxu0 0.0
    %857 = vmatpush1.msra.mxu0 0.0
    %858 = vmatprep.subr.mxu0 0.0
    %859 = vmatpush1.msra.mxu0 0.0
    %860 = vmatprep.subr.mxu0 0.0
    %861 = vmatpush1.msra.mxu0 0.0
    %862 = vmatprep.subr.mxu0 0.0
    %863 = vmatpush1.msra.mxu0 0.0
    %864 = vmatprep.subr.mxu0 0.0
    %865 = vmatpush1.msra.mxu0 0.0
    %866 = vmatprep.subr.mxu0 0.0
    %867 = vmatpush1.msra.mxu0 0.0
    %868 = vmatprep.mubr.f32.mxu0 0.0
    %869 = vmatmul.mubr.f32.gmra.mrb[0].mxu0 %v178
    %v870 = vpop.f32.mrb[0].mxu0
    %v871 = vadd.f32 0.0, %v870
    %v872 = vpop.f32.mrb[0].mxu0
    %873 = vmatprep.mubr.f32.mxu0 0.0
    %874 = vmatmul.mubr.f32.gmra.mrb[0].mxu0 %v181
    %v875 = vpop.f32.mrb[0].mxu0
    %v876 = vadd.f32 0.0, %v875
    %v877 = vpop.f32.mrb[0].mxu0
    %878 = vmatprep.mubr.f32.mxu0 0.0
    %879 = vmatmul.mubr.f32.gmra.mrb[0].mxu0 %v184
    %v880 = vpop.f32.mrb[0].mxu0
    %v881 = vadd.f32 0.0, %v880
    %v882 = vpop.f32.mrb[0].mxu0
    %883 = vmatprep.mubr.f32.mxu0 0.0
    %884 = vmatmul.mubr.f32.gmra.mrb[0].mxu0 %v187
    %v885 = vpop.f32.mrb[0].mxu0
    %v886 = vadd.f32 0.0, %v885
    %v887 = vpop.f32.mrb[0].mxu0
    %888 = vdwg.mxu0
    %v889 = vmul.f32 %v871, 2.0
    %v890 = vmul.f32 %v876, 2.0
    %v891 = vmul.f32 %v881, 2.0
    %v892 = vmul.f32 %v886, 2.0
    %v893 = vsub.f32 %v889, %v32
    %v894 = vsub.f32 %v890, %v33
    %v895 = vsub.f32 %v891, %v34
    %v896 = vsub.f32 %v892, %v35
    %901 = vrot.lane.b32.xlu0 %v786, 32
    %v902 = vpop.permute.xlu0 %901
    %903 = vrot.lane.b32.xlu0 %v791, 32
    %v904 = vpop.permute.xlu0 %903
    %905 = vrot.lane.b32.xlu0 %v796, 32
    %v906 = vpop.permute.xlu0 %905
    %907 = vrot.lane.b32.xlu0 %v801, 32
    %v908 = vpop.permute.xlu0 %907
    %917 = vrot.lane.b32.xlu0 %v893, 64
    %v918 = vpop.permute.xlu0 %917
    %919 = vrot.lane.b32.xlu0 %v894, 64
    %v920 = vpop.permute.xlu0 %919
    %921 = vrot.lane.b32.xlu0 %v895, 64
    %v922 = vpop.permute.xlu0 %921
    %923 = vrot.lane.b32.xlu0 %v896, 64
    %v924 = vpop.permute.xlu0 %923
    %v929 = vsel %vm176, %v32, %v902
    %v930 = vsel %vm176, %v33, %v904
    %v931 = vsel %vm176, %v34, %v906
    %v932 = vsel %vm176, %v35, %v908
    %vm933 = vcmask 523264
    %v934 = vsel %vm933, %v929, %v918
    %v935 = vsel %vm933, %v930, %v920
    %v936 = vsel %vm933, %v931, %v922
    %v937 = vsel %vm933, %v932, %v924
    %v938 = vsel %vm600, %v934, 0.0
    %v939 = vsel %vm600, %v935, 0.0
    %v940 = vsel %vm600, %v936, 0.0
    %v941 = vsel %vm600, %v937, 0.0
    %v942 = vmul.f32 %v47, %v938
    %v943 = vmul.f32 %v52, %v939
    %v944 = vmul.f32 %v57, %v940
    %v945 = vmul.f32 %v62, %v941
    %946 = vst [vmem:[#allocation2] sm:$0xff] %v942
    %947 = vst [vmem:[#allocation2 + $0x40] sm:$0xff] %v943
    %948 = vst [vmem:[#allocation2 + $0x80] sm:$0xff] %v944
    %949 = vst [vmem:[#allocation2 + $0xc0] sm:$0xff] %v945
    %v950 = vmul.f32 %v66, %v938
    %v951 = vmul.f32 %v70, %v939
    %v952 = vmul.f32 %v74, %v940
    %v953 = vmul.f32 %v78, %v941
    %954 = vst [vmem:[#allocation2 + $0x8] sm:$0xff] %v950
    %955 = vst [vmem:[#allocation2 + $0x48] sm:$0xff] %v951
    %956 = vst [vmem:[#allocation2 + $0x88] sm:$0xff] %v952
    %957 = vst [vmem:[#allocation2 + $0xc8] sm:$0xff] %v953
    %v958 = vmul.f32 %v82, %v938
    %v959 = vmul.f32 %v86, %v939
    %v960 = vmul.f32 %v90, %v940
    %v961 = vmul.f32 %v94, %v941
    %962 = vst [vmem:[#allocation2 + $0x10] sm:$0xff] %v958
    %963 = vst [vmem:[#allocation2 + $0x50] sm:$0xff] %v959
    %964 = vst [vmem:[#allocation2 + $0x90] sm:$0xff] %v960
    %965 = vst [vmem:[#allocation2 + $0xd0] sm:$0xff] %v961
    %v966 = vmul.f32 %v98, %v938
    %v967 = vmul.f32 %v102, %v939
    %v968 = vmul.f32 %v106, %v940
    %v969 = vmul.f32 %v110, %v941
    %970 = vst [vmem:[#allocation2 + $0x18] sm:$0xff] %v966
    %971 = vst [vmem:[#allocation2 + $0x58] sm:$0xff] %v967
    %972 = vst [vmem:[#allocation2 + $0x98] sm:$0xff] %v968
    %973 = vst [vmem:[#allocation2 + $0xd8] sm:$0xff] %v969
    %v974 = vmul.f32 %v114, %v938
    %v975 = vmul.f32 %v118, %v939
    %v976 = vmul.f32 %v122, %v940
    %v977 = vmul.f32 %v126, %v941
    %978 = vst [vmem:[#allocation2 + $0x20] sm:$0xff] %v974
    %979 = vst [vmem:[#allocation2 + $0x60] sm:$0xff] %v975
    %980 = vst [vmem:[#allocation2 + $0xa0] sm:$0xff] %v976
    %981 = vst [vmem:[#allocation2 + $0xe0] sm:$0xff] %v977
    %v982 = vmul.f32 %v130, %v938
    %v983 = vmul.f32 %v134, %v939
    %v984 = vmul.f32 %v138, %v940
    %v985 = vmul.f32 %v142, %v941
    %986 = vst [vmem:[#allocation2 + $0x28] sm:$0xff] %v982
    %987 = vst [vmem:[#allocation2 + $0x68] sm:$0xff] %v983
    %988 = vst [vmem:[#allocation2 + $0xa8] sm:$0xff] %v984
    %989 = vst [vmem:[#allocation2 + $0xe8] sm:$0xff] %v985
    %v990 = vmul.f32 %v146, %v938
    %v991 = vmul.f32 %v150, %v939
    %v992 = vmul.f32 %v154, %v940
    %v993 = vmul.f32 %v158, %v941
    %994 = vst [vmem:[#allocation2 + $0x30] sm:$0xff] %v990
    %995 = vst [vmem:[#allocation2 + $0x70] sm:$0xff] %v991
    %996 = vst [vmem:[#allocation2 + $0xb0] sm:$0xff] %v992
    %997 = vst [vmem:[#allocation2 + $0xf0] sm:$0xff] %v993
    %v998 = vmul.f32 %v162, %v938
    %v999 = vmul.f32 %v166, %v939
    %v1000 = vmul.f32 %v170, %v940
    %v1001 = vmul.f32 %v174, %v941
    %1002 = vst [vmem:[#allocation2 + $0x38] sm:$0xff] %v998
    %1003 = vst [vmem:[#allocation2 + $0x78] sm:$0xff] %v999
    %1004 = vst [vmem:[#allocation2 + $0xb8] sm:$0xff] %v1000
    %1005 = vst [vmem:[#allocation2 + $0xf8] sm:$0xff] %v1001
    %v1006 = vld [vmem:[#allocation2] sm:$0xff]
    %v1007 = vld [vmem:[#allocation2 + $0x8] sm:$0xff]
    %v1008 = vld [vmem:[#allocation2 + $0x10] sm:$0xff]
    %v1009 = vld [vmem:[#allocation2 + $0x18] sm:$0xff]
    %v1010 = vld [vmem:[#allocation2 + $0x20] sm:$0xff]
    %v1011 = vld [vmem:[#allocation2 + $0x28] sm:$0xff]
    %v1012 = vld [vmem:[#allocation2 + $0x30] sm:$0xff]
    %v1013 = vld [vmem:[#allocation2 + $0x38] sm:$0xff]
    %v1014 = vld [vmem:[#allocation2 + $0x40] sm:$0xff]
    %v1015 = vld [vmem:[#allocation2 + $0x48] sm:$0xff]
    %v1016 = vld [vmem:[#allocation2 + $0x50] sm:$0xff]
    %v1017 = vld [vmem:[#allocation2 + $0x58] sm:$0xff]
    %v1018 = vld [vmem:[#allocation2 + $0x60] sm:$0xff]
    %v1019 = vld [vmem:[#allocation2 + $0x68] sm:$0xff]
    %v1020 = vld [vmem:[#allocation2 + $0x70] sm:$0xff]
    %v1021 = vld [vmem:[#allocation2 + $0x78] sm:$0xff]
    %v1022 = vld [vmem:[#allocation2 + $0x80] sm:$0xff]
    %v1023 = vld [vmem:[#allocation2 + $0x88] sm:$0xff]
    %v1024 = vld [vmem:[#allocation2 + $0x90] sm:$0xff]
    %v1025 = vld [vmem:[#allocation2 + $0x98] sm:$0xff]
    %v1026 = vld [vmem:[#allocation2 + $0xa0] sm:$0xff]
    %v1027 = vld [vmem:[#allocation2 + $0xa8] sm:$0xff]
    %v1028 = vld [vmem:[#allocation2 + $0xb0] sm:$0xff]
    %v1029 = vld [vmem:[#allocation2 + $0xb8] sm:$0xff]
    %v1030 = vld [vmem:[#allocation2 + $0xc0] sm:$0xff]
    %v1031 = vld [vmem:[#allocation2 + $0xc8] sm:$0xff]
    %v1032 = vld [vmem:[#allocation2 + $0xd0] sm:$0xff]
    %v1033 = vld [vmem:[#allocation2 + $0xd8] sm:$0xff]
    %v1034 = vld [vmem:[#allocation2 + $0xe0] sm:$0xff]
    %v1035 = vld [vmem:[#allocation2 + $0xe8] sm:$0xff]
    %v1036 = vld [vmem:[#allocation2 + $0xf0] sm:$0xff]
    %v1037 = vld [vmem:[#allocation2 + $0xf8] sm:$0xff]
    %v1038 = vld [vmem:[%s5] sm:$0xf]
    %v1039 = vld [vmem:[%s5 + $0x4] sm:$0xf]
    %v1040 = vld [vmem:[%s5 + $0x8] sm:$0xf]
    %v1041 = vld [vmem:[%s5 + $0xc] sm:$0xf]
    %v1042 = vld [vmem:[%s5 + $0x10] sm:$0xf]
    %v1043 = vld [vmem:[%s5 + $0x14] sm:$0xf]
    %v1044 = vld [vmem:[%s5 + $0x18] sm:$0xf]
    %v1045 = vld [vmem:[%s5 + $0x1c] sm:$0xf]
    %v1046 = vld [vmem:[%s5 + $0x20] sm:$0xf]
    %v1047 = vld [vmem:[%s5 + $0x24] sm:$0xf]
    %v1048 = vld [vmem:[%s5 + $0x28] sm:$0xf]
    %v1049 = vld [vmem:[%s5 + $0x2c] sm:$0xf]
    %v1050 = vld [vmem:[%s5 + $0x30] sm:$0xf]
    %v1051 = vld [vmem:[%s5 + $0x34] sm:$0xf]
    %v1052 = vld [vmem:[%s5 + $0x38] sm:$0xf]
    %v1053 = vld [vmem:[%s5 + $0x3c] sm:$0xf]
    %v1054 = vld [vmem:[%s5 + $0x40] sm:$0xf]
    %v1055 = vld [vmem:[%s5 + $0x44] sm:$0xf]
    %v1056 = vld [vmem:[%s5 + $0x48] sm:$0xf]
    %v1057 = vld [vmem:[%s5 + $0x4c] sm:$0xf]
    %v1058 = vld [vmem:[%s5 + $0x50] sm:$0xf]
    %v1059 = vld [vmem:[%s5 + $0x54] sm:$0xf]
    %v1060 = vld [vmem:[%s5 + $0x58] sm:$0xf]
    %v1061 = vld [vmem:[%s5 + $0x5c] sm:$0xf]
    %v1062 = vld [vmem:[%s5 + $0x60] sm:$0xf]
    %v1063 = vld [vmem:[%s5 + $0x64] sm:$0xf]
    %v1064 = vld [vmem:[%s5 + $0x68] sm:$0xf]
    %v1065 = vld [vmem:[%s5 + $0x6c] sm:$0xf]
    %v1066 = vld [vmem:[%s5 + $0x70] sm:$0xf]
    %v1067 = vld [vmem:[%s5 + $0x74] sm:$0xf]
    %v1068 = vld [vmem:[%s5 + $0x78] sm:$0xf]
    %v1069 = vld [vmem:[%s5 + $0x7c] sm:$0xf]
    %v1070 = vld [vmem:[%s5 + $0x80] sm:$0xf]
    %v1071 = vld [vmem:[%s5 + $0x84] sm:$0xf]
    %v1072 = vld [vmem:[%s5 + $0x88] sm:$0xf]
    %v1073 = vld [vmem:[%s5 + $0x8c] sm:$0xf]
    %v1074 = vld [vmem:[%s5 + $0x90] sm:$0xf]
    %v1075 = vld [vmem:[%s5 + $0x94] sm:$0xf]
    %v1076 = vld [vmem:[%s5 + $0x98] sm:$0xf]
    %v1077 = vld [vmem:[%s5 + $0x9c] sm:$0xf]
    %v1078 = vld [vmem:[%s5 + $0xa0] sm:$0xf]
    %v1079 = vld [vmem:[%s5 + $0xa4] sm:$0xf]
    %v1080 = vld [vmem:[%s5 + $0xa8] sm:$0xf]
    %v1081 = vld [vmem:[%s5 + $0xac] sm:$0xf]
    %v1082 = vld [vmem:[%s5 + $0xb0] sm:$0xf]
    %v1083 = vld [vmem:[%s5 + $0xb4] sm:$0xf]
    %v1084 = vld [vmem:[%s5 + $0xb8] sm:$0xf]
    %v1085 = vld [vmem:[%s5 + $0xbc] sm:$0xf]
    %v1086 = vld [vmem:[%s5 + $0xc0] sm:$0xf]
    %v1087 = vld [vmem:[%s5 + $0xc4] sm:$0xf]
    %v1088 = vld [vmem:[%s5 + $0xc8] sm:$0xf]
    %v1089 = vld [vmem:[%s5 + $0xcc] sm:$0xf]
    %v1090 = vld [vmem:[%s5 + $0xd0] sm:$0xf]
    %v1091 = vld [vmem:[%s5 + $0xd4] sm:$0xf]
    %v1092 = vld [vmem:[%s5 + $0xd8] sm:$0xf]
    %v1093 = vld [vmem:[%s5 + $0xdc] sm:$0xf]
    %v1094 = vld [vmem:[%s5 + $0xe0] sm:$0xf]
    %v1095 = vld [vmem:[%s5 + $0xe4] sm:$0xf]
    %v1096 = vld [vmem:[%s5 + $0xe8] sm:$0xf]
    %v1097 = vld [vmem:[%s5 + $0xec] sm:$0xf]
    %v1098 = vld [vmem:[%s5 + $0xf0] sm:$0xf]
    %v1099 = vld [vmem:[%s5 + $0xf4] sm:$0xf]
    %v1100 = vld [vmem:[%s5 + $0xf8] sm:$0xf]
    %v1101 = vld [vmem:[%s5 + $0xfc] sm:$0xf]
    %v1102 = vld [vmem:[%s5 + $0x100] sm:$0xf]
    %v1103 = vld [vmem:[%s5 + $0x104] sm:$0xf]
    %v1104 = vld [vmem:[%s5 + $0x108] sm:$0xf]
    %v1105 = vld [vmem:[%s5 + $0x10c] sm:$0xf]
    %v1106 = vld [vmem:[%s5 + $0x110] sm:$0xf]
    %v1107 = vld [vmem:[%s5 + $0x114] sm:$0xf]
    %v1108 = vld [vmem:[%s5 + $0x118] sm:$0xf]
    %v1109 = vld [vmem:[%s5 + $0x11c] sm:$0xf]
    %v1110 = vld [vmem:[%s5 + $0x120] sm:$0xf]
    %v1111 = vld [vmem:[%s5 + $0x124] sm:$0xf]
    %v1112 = vld [vmem:[%s5 + $0x128] sm:$0xf]
    %v1113 = vld [vmem:[%s5 + $0x12c] sm:$0xf]
    %v1114 = vld [vmem:[%s5 + $0x130] sm:$0xf]
    %v1115 = vld [vmem:[%s5 + $0x134] sm:$0xf]
    %v1116 = vld [vmem:[%s5 + $0x138] sm:$0xf]
    %v1117 = vld [vmem:[%s5 + $0x13c] sm:$0xf]
    %v1118 = vld [vmem:[%s5 + $0x140] sm:$0xf]
    %v1119 = vld [vmem:[%s5 + $0x144] sm:$0xf]
    %v1120 = vld [vmem:[%s5 + $0x148] sm:$0xf]
    %v1121 = vld [vmem:[%s5 + $0x14c] sm:$0xf]
    %v1122 = vld [vmem:[%s5 + $0x150] sm:$0xf]
    %v1123 = vld [vmem:[%s5 + $0x154] sm:$0xf]
    %v1124 = vld [vmem:[%s5 + $0x158] sm:$0xf]
    %v1125 = vld [vmem:[%s5 + $0x15c] sm:$0xf]
    %v1126 = vld [vmem:[%s5 + $0x160] sm:$0xf]
    %v1127 = vld [vmem:[%s5 + $0x164] sm:$0xf]
    %v1128 = vld [vmem:[%s5 + $0x168] sm:$0xf]
    %v1129 = vld [vmem:[%s5 + $0x16c] sm:$0xf]
    %v1130 = vld [vmem:[%s5 + $0x170] sm:$0xf]
    %v1131 = vld [vmem:[%s5 + $0x174] sm:$0xf]
    %v1132 = vld [vmem:[%s5 + $0x178] sm:$0xf]
    %v1133 = vld [vmem:[%s5 + $0x17c] sm:$0xf]
    %v1134 = vld [vmem:[%s5 + $0x180] sm:$0xf]
    %v1135 = vld [vmem:[%s5 + $0x184] sm:$0xf]
    %v1136 = vld [vmem:[%s5 + $0x188] sm:$0xf]
    %v1137 = vld [vmem:[%s5 + $0x18c] sm:$0xf]
    %v1138 = vld [vmem:[%s5 + $0x190] sm:$0xf]
    %v1139 = vld [vmem:[%s5 + $0x194] sm:$0xf]
    %v1140 = vld [vmem:[%s5 + $0x198] sm:$0xf]
    %v1141 = vld [vmem:[%s5 + $0x19c] sm:$0xf]
    %v1142 = vld [vmem:[%s5 + $0x1a0] sm:$0xf]
    %v1143 = vld [vmem:[%s5 + $0x1a4] sm:$0xf]
    %v1144 = vld [vmem:[%s5 + $0x1a8] sm:$0xf]
    %v1145 = vld [vmem:[%s5 + $0x1ac] sm:$0xf]
    %v1146 = vld [vmem:[%s5 + $0x1b0] sm:$0xf]
    %v1147 = vld [vmem:[%s5 + $0x1b4] sm:$0xf]
    %v1148 = vld [vmem:[%s5 + $0x1b8] sm:$0xf]
    %v1149 = vld [vmem:[%s5 + $0x1bc] sm:$0xf]
    %v1150 = vld [vmem:[%s5 + $0x1c0] sm:$0xf]
    %v1151 = vld [vmem:[%s5 + $0x1c4] sm:$0xf]
    %v1152 = vld [vmem:[%s5 + $0x1c8] sm:$0xf]
    %v1153 = vld [vmem:[%s5 + $0x1cc] sm:$0xf]
    %v1154 = vld [vmem:[%s5 + $0x1d0] sm:$0xf]
    %v1155 = vld [vmem:[%s5 + $0x1d4] sm:$0xf]
    %v1156 = vld [vmem:[%s5 + $0x1d8] sm:$0xf]
    %v1157 = vld [vmem:[%s5 + $0x1dc] sm:$0xf]
    %v1158 = vld [vmem:[%s5 + $0x1e0] sm:$0xf]
    %v1159 = vld [vmem:[%s5 + $0x1e4] sm:$0xf]
    %v1160 = vld [vmem:[%s5 + $0x1e8] sm:$0xf]
    %v1161 = vld [vmem:[%s5 + $0x1ec] sm:$0xf]
    %v1162 = vld [vmem:[%s5 + $0x1f0] sm:$0xf]
    %v1163 = vld [vmem:[%s5 + $0x1f4] sm:$0xf]
    %v1164 = vld [vmem:[%s5 + $0x1f8] sm:$0xf]
    %v1165 = vld [vmem:[%s5 + $0x1fc] sm:$0xf]
    %v1166 = vpack.c.bf16 %v1014, %v1006
    %v1167 = vpack.c.bf16 %v1015, %v1007
    %v1168 = vpack.c.bf16 %v1016, %v1008
    %v1169 = vpack.c.bf16 %v1017, %v1009
    %v1170 = vpack.c.bf16 %v1018, %v1010
    %v1171 = vpack.c.bf16 %v1019, %v1011
    %v1172 = vpack.c.bf16 %v1020, %v1012
    %v1173 = vpack.c.bf16 %v1021, %v1013
    %v1174 = vpack.c.bf16 %v1030, %v1022
    %v1175 = vpack.c.bf16 %v1031, %v1023
    %v1176 = vpack.c.bf16 %v1032, %v1024
    %v1177 = vpack.c.bf16 %v1033, %v1025
    %v1178 = vpack.c.bf16 %v1034, %v1026
    %v1179 = vpack.c.bf16 %v1035, %v1027
    %v1180 = vpack.c.bf16 %v1036, %v1028
    %v1181 = vpack.c.bf16 %v1037, %v1029
    %v1310 = vunpack.c.l.b16 %v1038
    %v1311 = vunpack.c.l.b16 %v1039
    %v1312 = vunpack.c.l.b16 %v1040
    %v1313 = vunpack.c.l.b16 %v1041
    %v1314 = vunpack.c.l.b16 %v1042
    %v1315 = vunpack.c.l.b16 %v1043
    %v1316 = vunpack.c.l.b16 %v1044
    %v1317 = vunpack.c.l.b16 %v1045
    %v1318 = vunpack.c.l.b16 %v1046
    %v1319 = vunpack.c.l.b16 %v1047
    %v1320 = vunpack.c.l.b16 %v1048
    %v1321 = vunpack.c.l.b16 %v1049
    %v1322 = vunpack.c.l.b16 %v1050
    %v1323 = vunpack.c.l.b16 %v1051
    %v1324 = vunpack.c.l.b16 %v1052
    %v1325 = vunpack.c.l.b16 %v1053
    %v1326 = vunpack.c.l.b16 %v1054
    %v1327 = vunpack.c.l.b16 %v1055
    %v1328 = vunpack.c.l.b16 %v1056
    %v1329 = vunpack.c.l.b16 %v1057
    %v1330 = vunpack.c.l.b16 %v1058
    %v1331 = vunpack.c.l.b16 %v1059
    %v1332 = vunpack.c.l.b16 %v1060
    %v1333 = vunpack.c.l.b16 %v1061
    %v1334 = vunpack.c.l.b16 %v1062
    %v1335 = vunpack.c.l.b16 %v1063
    %v1336 = vunpack.c.l.b16 %v1064
    %v1337 = vunpack.c.l.b16 %v1065
    %v1338 = vunpack.c.l.b16 %v1066
    %v1339 = vunpack.c.l.b16 %v1067
    %v1340 = vunpack.c.l.b16 %v1068
    %v1341 = vunpack.c.l.b16 %v1069
    %v1342 = vunpack.c.l.b16 %v1070
    %v1343 = vunpack.c.l.b16 %v1071
    %v1344 = vunpack.c.l.b16 %v1072
    %v1345 = vunpack.c.l.b16 %v1073
    %v1346 = vunpack.c.l.b16 %v1074
    %v1347 = vunpack.c.l.b16 %v1075
    %v1348 = vunpack.c.l.b16 %v1076
    %v1349 = vunpack.c.l.b16 %v1077
    %v1350 = vunpack.c.l.b16 %v1078
    %v1351 = vunpack.c.l.b16 %v1079
    %v1352 = vunpack.c.l.b16 %v1080
    %v1353 = vunpack.c.l.b16 %v1081
    %v1354 = vunpack.c.l.b16 %v1082
    %v1355 = vunpack.c.l.b16 %v1083
    %v1356 = vunpack.c.l.b16 %v1084
    %v1357 = vunpack.c.l.b16 %v1085
    %v1358 = vunpack.c.l.b16 %v1086
    %v1359 = vunpack.c.l.b16 %v1087
    %v1360 = vunpack.c.l.b16 %v1088
    %v1361 = vunpack.c.l.b16 %v1089
    %v1362 = vunpack.c.l.b16 %v1090
    %v1363 = vunpack.c.l.b16 %v1091
    %v1364 = vunpack.c.l.b16 %v1092
    %v1365 = vunpack.c.l.b16 %v1093
    %v1366 = vunpack.c.l.b16 %v1094
    %v1367 = vunpack.c.l.b16 %v1095
    %v1368 = vunpack.c.l.b16 %v1096
    %v1369 = vunpack.c.l.b16 %v1097
    %v1370 = vunpack.c.l.b16 %v1098
    %v1371 = vunpack.c.l.b16 %v1099
    %v1372 = vunpack.c.l.b16 %v1100
    %v1373 = vunpack.c.l.b16 %v1101
    %v1374 = vunpack.c.l.b16 %v1102
    %v1375 = vunpack.c.l.b16 %v1103
    %v1376 = vunpack.c.l.b16 %v1104
    %v1377 = vunpack.c.l.b16 %v1105
    %v1378 = vunpack.c.l.b16 %v1106
    %v1379 = vunpack.c.l.b16 %v1107
    %v1380 = vunpack.c.l.b16 %v1108
    %v1381 = vunpack.c.l.b16 %v1109
    %v1382 = vunpack.c.l.b16 %v1110
    %v1383 = vunpack.c.l.b16 %v1111
    %v1384 = vunpack.c.l.b16 %v1112
    %v1385 = vunpack.c.l.b16 %v1113
    %v1386 = vunpack.c.l.b16 %v1114
    %v1387 = vunpack.c.l.b16 %v1115
    %v1388 = vunpack.c.l.b16 %v1116
    %v1389 = vunpack.c.l.b16 %v1117
    %v1390 = vunpack.c.l.b16 %v1118
    %v1391 = vunpack.c.l.b16 %v1119
    %v1392 = vunpack.c.l.b16 %v1120
    %v1393 = vunpack.c.l.b16 %v1121
    %v1394 = vunpack.c.l.b16 %v1122
    %v1395 = vunpack.c.l.b16 %v1123
    %v1396 = vunpack.c.l.b16 %v1124
    %v1397 = vunpack.c.l.b16 %v1125
    %v1398 = vunpack.c.l.b16 %v1126
    %v1399 = vunpack.c.l.b16 %v1127
    %v1400 = vunpack.c.l.b16 %v1128
    %v1401 = vunpack.c.l.b16 %v1129
    %v1402 = vunpack.c.l.b16 %v1130
    %v1403 = vunpack.c.l.b16 %v1131
    %v1404 = vunpack.c.l.b16 %v1132
    %v1405 = vunpack.c.l.b16 %v1133
    %v1406 = vunpack.c.l.b16 %v1134
    %v1407 = vunpack.c.l.b16 %v1135
    %v1408 = vunpack.c.l.b16 %v1136
    %v1409 = vunpack.c.l.b16 %v1137
    %v1410 = vunpack.c.l.b16 %v1138
    %v1411 = vunpack.c.l.b16 %v1139
    %v1412 = vunpack.c.l.b16 %v1140
    %v1413 = vunpack.c.l.b16 %v1141
    %v1414 = vunpack.c.l.b16 %v1142
    %v1415 = vunpack.c.l.b16 %v1143
    %v1416 = vunpack.c.l.b16 %v1144
    %v1417 = vunpack.c.l.b16 %v1145
    %v1418 = vunpack.c.l.b16 %v1146
    %v1419 = vunpack.c.l.b16 %v1147
    %v1420 = vunpack.c.l.b16 %v1148
    %v1421 = vunpack.c.l.b16 %v1149
    %v1422 = vunpack.c.l.b16 %v1150
    %v1423 = vunpack.c.l.b16 %v1151
    %v1424 = vunpack.c.l.b16 %v1152
    %v1425 = vunpack.c.l.b16 %v1153
    %v1426 = vunpack.c.l.b16 %v1154
    %v1427 = vunpack.c.l.b16 %v1155
    %v1428 = vunpack.c.l.b16 %v1156
    %v1429 = vunpack.c.l.b16 %v1157
    %v1430 = vunpack.c.l.b16 %v1158
    %v1431 = vunpack.c.l.b16 %v1159
    %v1432 = vunpack.c.l.b16 %v1160
    %v1433 = vunpack.c.l.b16 %v1161
    %v1434 = vunpack.c.l.b16 %v1162
    %v1435 = vunpack.c.l.b16 %v1163
    %v1436 = vunpack.c.l.b16 %v1164
    %v1437 = vunpack.c.l.b16 %v1165
    %v1438 = vpack.c.b16 %v1311, %v1310
    %v1439 = vpack.c.b16 %v1313, %v1312
    %v1440 = vpack.c.b16 %v1315, %v1314
    %v1441 = vpack.c.b16 %v1317, %v1316
    %v1442 = vpack.c.b16 %v1319, %v1318
    %v1443 = vpack.c.b16 %v1321, %v1320
    %v1444 = vpack.c.b16 %v1323, %v1322
    %v1445 = vpack.c.b16 %v1325, %v1324
    %v1446 = vpack.c.b16 %v1327, %v1326
    %v1447 = vpack.c.b16 %v1329, %v1328
    %v1448 = vpack.c.b16 %v1331, %v1330
    %v1449 = vpack.c.b16 %v1333, %v1332
    %v1450 = vpack.c.b16 %v1335, %v1334
    %v1451 = vpack.c.b16 %v1337, %v1336
    %v1452 = vpack.c.b16 %v1339, %v1338
    %v1453 = vpack.c.b16 %v1341, %v1340
    %v1454 = vpack.c.b16 %v1343, %v1342
    %v1455 = vpack.c.b16 %v1345, %v1344
    %v1456 = vpack.c.b16 %v1347, %v1346
    %v1457 = vpack.c.b16 %v1349, %v1348
    %v1458 = vpack.c.b16 %v1351, %v1350
    %v1459 = vpack.c.b16 %v1353, %v1352
    %v1460 = vpack.c.b16 %v1355, %v1354
    %v1461 = vpack.c.b16 %v1357, %v1356
    %v1462 = vpack.c.b16 %v1359, %v1358
    %v1463 = vpack.c.b16 %v1361, %v1360
    %v1464 = vpack.c.b16 %v1363, %v1362
    %v1465 = vpack.c.b16 %v1365, %v1364
    %v1466 = vpack.c.b16 %v1367, %v1366
    %v1467 = vpack.c.b16 %v1369, %v1368
    %v1468 = vpack.c.b16 %v1371, %v1370
    %v1469 = vpack.c.b16 %v1373, %v1372
    %v1470 = vpack.c.b16 %v1375, %v1374
    %v1471 = vpack.c.b16 %v1377, %v1376
    %v1472 = vpack.c.b16 %v1379, %v1378
    %v1473 = vpack.c.b16 %v1381, %v1380
    %v1474 = vpack.c.b16 %v1383, %v1382
    %v1475 = vpack.c.b16 %v1385, %v1384
    %v1476 = vpack.c.b16 %v1387, %v1386
    %v1477 = vpack.c.b16 %v1389, %v1388
    %v1478 = vpack.c.b16 %v1391, %v1390
    %v1479 = vpack.c.b16 %v1393, %v1392
    %v1480 = vpack.c.b16 %v1395, %v1394
    %v1481 = vpack.c.b16 %v1397, %v1396
    %v1482 = vpack.c.b16 %v1399, %v1398
    %v1483 = vpack.c.b16 %v1401, %v1400
    %v1484 = vpack.c.b16 %v1403, %v1402
    %v1485 = vpack.c.b16 %v1405, %v1404
    %v1486 = vpack.c.b16 %v1407, %v1406
    %v1487 = vpack.c.b16 %v1409, %v1408
    %v1488 = vpack.c.b16 %v1411, %v1410
    %v1489 = vpack.c.b16 %v1413, %v1412
    %v1490 = vpack.c.b16 %v1415, %v1414
    %v1491 = vpack.c.b16 %v1417, %v1416
    %v1492 = vpack.c.b16 %v1419, %v1418
    %v1493 = vpack.c.b16 %v1421, %v1420
    %v1494 = vpack.c.b16 %v1423, %v1422
    %v1495 = vpack.c.b16 %v1425, %v1424
    %v1496 = vpack.c.b16 %v1427, %v1426
    %v1497 = vpack.c.b16 %v1429, %v1428
    %v1498 = vpack.c.b16 %v1431, %v1430
    %v1499 = vpack.c.b16 %v1433, %v1432
    %v1500 = vpack.c.b16 %v1435, %v1434
    %v1501 = vpack.c.b16 %v1437, %v1436
    %1566 = vmatprep.subr.bf16.mxu0 0
    %1567 = vmatpush1.bf16.msra.mxu0 %v1438
    %1568 = vmatprep.subr.bf16.mxu0 0
    %1569 = vmatpush1.bf16.msra.mxu0 %v1439
    %1570 = vmatprep.subr.bf16.mxu0 0
    %1571 = vmatpush1.bf16.msra.mxu0 %v1440
    %1572 = vmatprep.subr.bf16.mxu0 0
    %1573 = vmatpush1.bf16.msra.mxu0 %v1441
    %1574 = vmatprep.subr.bf16.mxu0 0
    %1575 = vmatpush1.bf16.msra.mxu0 %v1442
    %1576 = vmatprep.subr.bf16.mxu0 0
    %1577 = vmatpush1.bf16.msra.mxu0 %v1443
    %1578 = vmatprep.subr.bf16.mxu0 0
    %1579 = vmatpush1.bf16.msra.mxu0 %v1444
    %1580 = vmatprep.subr.bf16.mxu0 0
    %1581 = vmatpush1.bf16.msra.mxu0 %v1445
    %1582 = vmatprep.subr.bf16.mxu0 0
    %1583 = vmatpush1.bf16.msra.mxu0 %v1446
    %1584 = vmatprep.subr.bf16.mxu0 0
    %1585 = vmatpush1.bf16.msra.mxu0 %v1447
    %1586 = vmatprep.subr.bf16.mxu0 0
    %1587 = vmatpush1.bf16.msra.mxu0 %v1448
    %1588 = vmatprep.subr.bf16.mxu0 0
    %1589 = vmatpush1.bf16.msra.mxu0 %v1449
    %1590 = vmatprep.subr.bf16.mxu0 0
    %1591 = vmatpush1.bf16.msra.mxu0 %v1450
    %1592 = vmatprep.subr.bf16.mxu0 0
    %1593 = vmatpush1.bf16.msra.mxu0 %v1451
    %1594 = vmatprep.subr.bf16.mxu0 0
    %1595 = vmatpush1.bf16.msra.mxu0 %v1452
    %1596 = vmatprep.subr.bf16.mxu0 0
    %1597 = vmatpush1.bf16.msra.mxu0 %v1453
    %1598 = vmatprep.mubr.bf16.mxu0 %v1167
    %1599 = vmatmul.mubr.bf16.gmra.mrb[0].mxu0 %v1166
    %v1600 = vpop.f32.mrb[0].mxu0
    %v1601 = vadd.f32 0.0, %v1600
    %v1602 = vpop.f32.mrb[0].mxu0
    %v1603 = vpop.f32.mrb[0].mxu0
    %v1604 = vadd.f32 0.0, %v1603
    %v1605 = vpop.f32.mrb[0].mxu0
    %1606 = vmatprep.mubr.bf16.mxu0 %v1175
    %1607 = vmatmul.mubr.bf16.gmra.mrb[0].mxu0 %v1174
    %v1608 = vpop.f32.mrb[0].mxu0
    %v1609 = vadd.f32 0.0, %v1608
    %v1610 = vpop.f32.mrb[0].mxu0
    %v1611 = vpop.f32.mrb[0].mxu0
    %v1612 = vadd.f32 0.0, %v1611
    %v1613 = vpop.f32.mrb[0].mxu0
    %1614 = vdwg.mxu0
    %1615 = vmatprep.subr.bf16.mxu0 0
    %1616 = vmatpush1.bf16.msra.mxu0 %v1454
    %1617 = vmatprep.subr.bf16.mxu0 0
    %1618 = vmatpush1.bf16.msra.mxu0 %v1455
    %1619 = vmatprep.subr.bf16.mxu0 0
    %1620 = vmatpush1.bf16.msra.mxu0 %v1456
    %1621 = vmatprep.subr.bf16.mxu0 0
    %1622 = vmatpush1.bf16.msra.mxu0 %v1457
    %1623 = vmatprep.subr.bf16.mxu0 0
    %1624 = vmatpush1.bf16.msra.mxu0 %v1458
    %1625 = vmatprep.subr.bf16.mxu0 0
    %1626 = vmatpush1.bf16.msra.mxu0 %v1459
    %1627 = vmatprep.subr.bf16.mxu0 0
    %1628 = vmatpush1.bf16.msra.mxu0 %v1460
    %1629 = vmatprep.subr.bf16.mxu0 0
    %1630 = vmatpush1.bf16.msra.mxu0 %v1461
    %1631 = vmatprep.subr.bf16.mxu0 0
    %1632 = vmatpush1.bf16.msra.mxu0 %v1462
    %1633 = vmatprep.subr.bf16.mxu0 0
    %1634 = vmatpush1.bf16.msra.mxu0 %v1463
    %1635 = vmatprep.subr.bf16.mxu0 0
    %1636 = vmatpush1.bf16.msra.mxu0 %v1464
    %1637 = vmatprep.subr.bf16.mxu0 0
    %1638 = vmatpush1.bf16.msra.mxu0 %v1465
    %1639 = vmatprep.subr.bf16.mxu0 0
    %1640 = vmatpush1.bf16.msra.mxu0 %v1466
    %1641 = vmatprep.subr.bf16.mxu0 0
    %1642 = vmatpush1.bf16.msra.mxu0 %v1467
    %1643 = vmatprep.subr.bf16.mxu0 0
    %1644 = vmatpush1.bf16.msra.mxu0 %v1468
    %1645 = vmatprep.subr.bf16.mxu0 0
    %1646 = vmatpush1.bf16.msra.mxu0 %v1469
    %1647 = vmatprep.mubr.bf16.mxu0 %v1169
    %1648 = vmatmul.mubr.bf16.gmra.mrb[0].mxu0 %v1168
    %v1649 = vpop.f32.mrb[0].mxu0
    %v1650 = vadd.f32 %v1601, %v1649
    %v1651 = vpop.f32.mrb[0].mxu0
    %v1652 = vpop.f32.mrb[0].mxu0
    %v1653 = vadd.f32 %v1604, %v1652
    %v1654 = vpop.f32.mrb[0].mxu0
    %1655 = vmatprep.mubr.bf16.mxu0 %v1177
    %1656 = vmatmul.mubr.bf16.gmra.mrb[0].mxu0 %v1176
    %v1657 = vpop.f32.mrb[0].mxu0
    %v1658 = vadd.f32 %v1609, %v1657
    %v1659 = vpop.f32.mrb[0].mxu0
    %v1660 = vpop.f32.mrb[0].mxu0
    %v1661 = vadd.f32 %v1612, %v1660
    %v1662 = vpop.f32.mrb[0].mxu0
    %1663 = vdwg.mxu0
    %1664 = vmatprep.subr.bf16.mxu0 0
    %1665 = vmatpush1.bf16.msra.mxu0 %v1470
    %1666 = vmatprep.subr.bf16.mxu0 0
    %1667 = vmatpush1.bf16.msra.mxu0 %v1471
    %1668 = vmatprep.subr.bf16.mxu0 0
    %1669 = vmatpush1.bf16.msra.mxu0 %v1472
    %1670 = vmatprep.subr.bf16.mxu0 0
    %1671 = vmatpush1.bf16.msra.mxu0 %v1473
    %1672 = vmatprep.subr.bf16.mxu0 0
    %1673 = vmatpush1.bf16.msra.mxu0 %v1474
    %1674 = vmatprep.subr.bf16.mxu0 0
    %1675 = vmatpush1.bf16.msra.mxu0 %v1475
    %1676 = vmatprep.subr.bf16.mxu0 0
    %1677 = vmatpush1.bf16.msra.mxu0 %v1476
    %1678 = vmatprep.subr.bf16.mxu0 0
    %1679 = vmatpush1.bf16.msra.mxu0 %v1477
    %1680 = vmatprep.subr.bf16.mxu0 0
    %1681 = vmatpush1.bf16.msra.mxu0 %v1478
    %1682 = vmatprep.subr.bf16.mxu0 0
    %1683 = vmatpush1.bf16.msra.mxu0 %v1479
    %1684 = vmatprep.subr.bf16.mxu0 0
    %1685 = vmatpush1.bf16.msra.mxu0 %v1480
    %1686 = vmatprep.subr.bf16.mxu0 0
    %1687 = vmatpush1.bf16.msra.mxu0 %v1481
    %1688 = vmatprep.subr.bf16.mxu0 0
    %1689 = vmatpush1.bf16.msra.mxu0 %v1482
    %1690 = vmatprep.subr.bf16.mxu0 0
    %1691 = vmatpush1.bf16.msra.mxu0 %v1483
    %1692 = vmatprep.subr.bf16.mxu0 0
    %1693 = vmatpush1.bf16.msra.mxu0 %v1484
    %1694 = vmatprep.subr.bf16.mxu0 0
    %1695 = vmatpush1.bf16.msra.mxu0 %v1485
    %1696 = vmatprep.mubr.bf16.mxu0 %v1171
    %1697 = vmatmul.mubr.bf16.gmra.mrb[0].mxu0 %v1170
    %v1698 = vpop.f32.mrb[0].mxu0
    %v1699 = vadd.f32 %v1650, %v1698
    %v1700 = vpop.f32.mrb[0].mxu0
    %v1701 = vpop.f32.mrb[0].mxu0
    %v1702 = vadd.f32 %v1653, %v1701
    %v1703 = vpop.f32.mrb[0].mxu0
    %1704 = vmatprep.mubr.bf16.mxu0 %v1179
    %1705 = vmatmul.mubr.bf16.gmra.mrb[0].mxu0 %v1178
    %v1706 = vpop.f32.mrb[0].mxu0
    %v1707 = vadd.f32 %v1658, %v1706
    %v1708 = vpop.f32.mrb[0].mxu0
    %v1709 = vpop.f32.mrb[0].mxu0
    %v1710 = vadd.f32 %v1661, %v1709
    %v1711 = vpop.f32.mrb[0].mxu0
    %1712 = vdwg.mxu0
    %1713 = vmatprep.subr.bf16.mxu0 0
    %1714 = vmatpush1.bf16.msra.mxu0 %v1486
    %1715 = vmatprep.subr.bf16.mxu0 0
    %1716 = vmatpush1.bf16.msra.mxu0 %v1487
    %1717 = vmatprep.subr.bf16.mxu0 0
    %1718 = vmatpush1.bf16.msra.mxu0 %v1488
    %1719 = vmatprep.subr.bf16.mxu0 0
    %1720 = vmatpush1.bf16.msra.mxu0 %v1489
    %1721 = vmatprep.subr.bf16.mxu0 0
    %1722 = vmatpush1.bf16.msra.mxu0 %v1490
    %1723 = vmatprep.subr.bf16.mxu0 0
    %1724 = vmatpush1.bf16.msra.mxu0 %v1491
    %1725 = vmatprep.subr.bf16.mxu0 0
    %1726 = vmatpush1.bf16.msra.mxu0 %v1492
    %1727 = vmatprep.subr.bf16.mxu0 0
    %1728 = vmatpush1.bf16.msra.mxu0 %v1493
    %1729 = vmatprep.subr.bf16.mxu0 0
    %1730 = vmatpush1.bf16.msra.mxu0 %v1494
    %1731 = vmatprep.subr.bf16.mxu0 0
    %1732 = vmatpush1.bf16.msra.mxu0 %v1495
    %1733 = vmatprep.subr.bf16.mxu0 0
    %1734 = vmatpush1.bf16.msra.mxu0 %v1496
    %1735 = vmatprep.subr.bf16.mxu0 0
    %1736 = vmatpush1.bf16.msra.mxu0 %v1497
    %1737 = vmatprep.subr.bf16.mxu0 0
    %1738 = vmatpush1.bf16.msra.mxu0 %v1498
    %1739 = vmatprep.subr.bf16.mxu0 0
    %1740 = vmatpush1.bf16.msra.mxu0 %v1499
    %1741 = vmatprep.subr.bf16.mxu0 0
    %1742 = vmatpush1.bf16.msra.mxu0 %v1500
    %1743 = vmatprep.subr.bf16.mxu0 0
    %1744 = vmatpush1.bf16.msra.mxu0 %v1501
    %1745 = vmatprep.mubr.bf16.mxu0 %v1173
    %1746 = vmatmul.mubr.bf16.gmra.mrb[0].mxu0 %v1172
    %v1747 = vpop.f32.mrb[0].mxu0
    %v1748 = vadd.f32 %v1699, %v1747
    %v1749 = vpop.f32.mrb[0].mxu0
    %v1750 = vpop.f32.mrb[0].mxu0
    %v1751 = vadd.f32 %v1702, %v1750
    %v1752 = vpop.f32.mrb[0].mxu0
    %1753 = vmatprep.mubr.bf16.mxu0 %v1181
    %1754 = vmatmul.mubr.bf16.gmra.mrb[0].mxu0 %v1180
    %v1755 = vpop.f32.mrb[0].mxu0
    %v1756 = vadd.f32 %v1707, %v1755
    %v1757 = vpop.f32.mrb[0].mxu0
    %v1758 = vpop.f32.mrb[0].mxu0
    %v1759 = vadd.f32 %v1710, %v1758
    %v1760 = vpop.f32.mrb[0].mxu0
    %1761 = vdwg.mxu0
    %v1762 = vadd.f32 %v705, %v1748
    %v1763 = vadd.f32 %v708, %v1751
    %v1764 = vadd.f32 %v713, %v1756
    %v1765 = vadd.f32 %v716, %v1759
    %v1766 = vxor.u32 %v1762, 2147483648
    %v1767 = vxor.u32 %v1763, 2147483648
    %v1768 = vxor.u32 %v1764, 2147483648
    %v1769 = vxor.u32 %v1765, 2147483648
    %v1770 = vmul.f32 %v1766, 1.442695
    %v1771 = vpow.pop %v1770
    %v1772 = vmul.f32 %v1767, 1.442695
    %v1773 = vpow.pop %v1772
    %v1774 = vmul.f32 %v1768, 1.442695
    %v1775 = vpow.pop %v1774
    %v1776 = vmul.f32 %v1769, 1.442695
    %v1777 = vpow.pop %v1776
    %v1778 = vadd.f32 %v1771, 1.0
    %v1779 = vadd.f32 %v1773, 1.0
    %v1780 = vadd.f32 %v1775, 1.0
    %v1781 = vadd.f32 %v1777, 1.0
    %v1782 = vrcp.pop %v1778
    %v1783 = vmul.f32 1.0, %v1782
    %v1784 = vrcp.pop %v1779
    %v1785 = vmul.f32 1.0, %v1784
    %v1786 = vrcp.pop %v1780
    %v1787 = vmul.f32 1.0, %v1786
    %v1788 = vrcp.pop %v1781
    %v1789 = vmul.f32 1.0, %v1788
    %v1790 = vmul.f32 %v1783, %v32
    %v1791 = vmul.f32 %v1785, %v33
    %v1792 = vmul.f32 %v1787, %v34
    %v1793 = vmul.f32 %v1789, %v35
    %1794 = vmatprep.subr.mxu0 0.0
    %1795 = vmatpush1.msra.mxu0 %v1790
    %1796 = vmatprep.subr.mxu0 0.0
    %1797 = vmatpush1.msra.mxu0 %v1791
    %1798 = vmatprep.subr.mxu0 0.0
    %1799 = vmatpush1.msra.mxu0 %v1792
    %1800 = vmatprep.subr.mxu0 0.0
    %1801 = vmatpush1.msra.mxu0 %v1793
    %1802 = vmatprep.subr.mxu0 0.0
    %1803 = vmatpush1.msra.mxu0 0.0
    %1804 = vmatprep.subr.mxu0 0.0
    %1805 = vmatpush1.msra.mxu0 0.0
    %1806 = vmatprep.subr.mxu0 0.0
    %1807 = vmatpush1.msra.mxu0 0.0
    %1808 = vmatprep.subr.mxu0 0.0
    %1809 = vmatpush1.msra.mxu0 0.0
    %1810 = vmatprep.subr.mxu0 0.0
    %1811 = vmatpush1.msra.mxu0 0.0
    %1812 = vmatprep.subr.mxu0 0.0
    %1813 = vmatpush1.msra.mxu0 0.0
    %1814 = vmatprep.subr.mxu0 0.0
    %1815 = vmatpush1.msra.mxu0 0.0
    %1816 = vmatprep.subr.mxu0 0.0
    %1817 = vmatpush1.msra.mxu0 0.0
    %1818 = vmatprep.subr.mxu0 0.0
    %1819 = vmatpush1.msra.mxu0 0.0
    %1820 = vmatprep.subr.mxu0 0.0
    %1821 = vmatpush1.msra.mxu0 0.0
    %1822 = vmatprep.subr.mxu0 0.0
    %1823 = vmatpush1.msra.mxu0 0.0
    %1824 = vmatprep.subr.mxu0 0.0
    %1825 = vmatpush1.msra.mxu0 0.0
    %1826 = vmatprep.subr.mxu0 0.0
    %1827 = vmatpush1.msra.mxu0 0.0
    %1828 = vmatprep.subr.mxu0 0.0
    %1829 = vmatpush1.msra.mxu0 0.0
    %1830 = vmatprep.subr.mxu0 0.0
    %1831 = vmatpush1.msra.mxu0 0.0
    %1832 = vmatprep.subr.mxu0 0.0
    %1833 = vmatpush1.msra.mxu0 0.0
    %1834 = vmatprep.subr.mxu0 0.0
    %1835 = vmatpush1.msra.mxu0 0.0
    %1836 = vmatprep.subr.mxu0 0.0
    %1837 = vmatpush1.msra.mxu0 0.0
    %1838 = vmatprep.subr.mxu0 0.0
    %1839 = vmatpush1.msra.mxu0 0.0
    %1840 = vmatprep.subr.mxu0 0.0
    %1841 = vmatpush1.msra.mxu0 0.0
    %1842 = vmatprep.subr.mxu0 0.0
    %1843 = vmatpush1.msra.mxu0 0.0
    %1844 = vmatprep.subr.mxu0 0.0
    %1845 = vmatpush1.msra.mxu0 0.0
    %1846 = vmatprep.subr.mxu0 0.0
    %1847 = vmatpush1.msra.mxu0 0.0
    %1848 = vmatprep.subr.mxu0 0.0
    %1849 = vmatpush1.msra.mxu0 0.0
    %1850 = vmatprep.subr.mxu0 0.0
    %1851 = vmatpush1.msra.mxu0 0.0
    %1852 = vmatprep.subr.mxu0 0.0
    %1853 = vmatpush1.msra.mxu0 0.0
    %1854 = vmatprep.subr.mxu0 0.0
    %1855 = vmatpush1.msra.mxu0 0.0
    %1856 = vmatprep.subr.mxu0 0.0
    %1857 = vmatpush1.msra.mxu0 0.0
    %1858 = vmatprep.mubr.f32.mxu0 0.0
    %1859 = vmatmul.mubr.f32.gmra.mrb[0].mxu0 %v178
    %v1860 = vpop.f32.mrb[0].mxu0
    %v1861 = vadd.f32 0.0, %v1860
    %v1862 = vpop.f32.mrb[0].mxu0
    %1863 = vmatprep.mubr.f32.mxu0 0.0
    %1864 = vmatmul.mubr.f32.gmra.mrb[0].mxu0 %v181
    %v1865 = vpop.f32.mrb[0].mxu0
    %v1866 = vadd.f32 0.0, %v1865
    %v1867 = vpop.f32.mrb[0].mxu0
    %1868 = vmatprep.mubr.f32.mxu0 0.0
    %1869 = vmatmul.mubr.f32.gmra.mrb[0].mxu0 %v184
    %v1870 = vpop.f32.mrb[0].mxu0
    %v1871 = vadd.f32 0.0, %v1870
    %v1872 = vpop.f32.mrb[0].mxu0
    %1873 = vmatprep.mubr.f32.mxu0 0.0
    %1874 = vmatmul.mubr.f32.gmra.mrb[0].mxu0 %v187
    %v1875 = vpop.f32.mrb[0].mxu0
    %v1876 = vadd.f32 0.0, %v1875
    %v1877 = vpop.f32.mrb[0].mxu0
    %1878 = vdwg.mxu0
    %1879 = vmatprep.subr.mxu0 0.0
    %1880 = vmatpush1.msra.mxu0 %v1861
    %1881 = vmatprep.subr.mxu0 0.0
    %1882 = vmatpush1.msra.mxu0 %v1866
    %1883 = vmatprep.subr.mxu0 0.0
    %1884 = vmatpush1.msra.mxu0 %v1871
    %1885 = vmatprep.subr.mxu0 0.0
    %1886 = vmatpush1.msra.mxu0 %v1876
    %1887 = vmatprep.subr.mxu0 0.0
    %1888 = vmatpush1.msra.mxu0 0.0
    %1889 = vmatprep.subr.mxu0 0.0
    %1890 = vmatpush1.msra.mxu0 0.0
    %1891 = vmatprep.subr.mxu0 0.0
    %1892 = vmatpush1.msra.mxu0 0.0
    %1893 = vmatprep.subr.mxu0 0.0
    %1894 = vmatpush1.msra.mxu0 0.0
    %1895 = vmatprep.subr.mxu0 0.0
    %1896 = vmatpush1.msra.mxu0 0.0
    %1897 = vmatprep.subr.mxu0 0.0
    %1898 = vmatpush1.msra.mxu0 0.0
    %1899 = vmatprep.subr.mxu0 0.0
    %1900 = vmatpush1.msra.mxu0 0.0
    %1901 = vmatprep.subr.mxu0 0.0
    %1902 = vmatpush1.msra.mxu0 0.0
    %1903 = vmatprep.subr.mxu0 0.0
    %1904 = vmatpush1.msra.mxu0 0.0
    %1905 = vmatprep.subr.mxu0 0.0
    %1906 = vmatpush1.msra.mxu0 0.0
    %1907 = vmatprep.subr.mxu0 0.0
    %1908 = vmatpush1.msra.mxu0 0.0
    %1909 = vmatprep.subr.mxu0 0.0
    %1910 = vmatpush1.msra.mxu0 0.0
    %1911 = vmatprep.subr.mxu0 0.0
    %1912 = vmatpush1.msra.mxu0 0.0
    %1913 = vmatprep.subr.mxu0 0.0
    %1914 = vmatpush1.msra.mxu0 0.0
    %1915 = vmatprep.subr.mxu0 0.0
    %1916 = vmatpush1.msra.mxu0 0.0
    %1917 = vmatprep.subr.mxu0 0.0
    %1918 = vmatpush1.msra.mxu0 0.0
    %1919 = vmatprep.subr.mxu0 0.0
    %1920 = vmatpush1.msra.mxu0 0.0
    %1921 = vmatprep.subr.mxu0 0.0
    %1922 = vmatpush1.msra.mxu0 0.0
    %1923 = vmatprep.subr.mxu0 0.0
    %1924 = vmatpush1.msra.mxu0 0.0
    %1925 = vmatprep.subr.mxu0 0.0
    %1926 = vmatpush1.msra.mxu0 0.0
    %1927 = vmatprep.subr.mxu0 0.0
    %1928 = vmatpush1.msra.mxu0 0.0
    %1929 = vmatprep.subr.mxu0 0.0
    %1930 = vmatpush1.msra.mxu0 0.0
    %1931 = vmatprep.subr.mxu0 0.0
    %1932 = vmatpush1.msra.mxu0 0.0
    %1933 = vmatprep.subr.mxu0 0.0
    %1934 = vmatpush1.msra.mxu0 0.0
    %1935 = vmatprep.subr.mxu0 0.0
    %1936 = vmatpush1.msra.mxu0 0.0
    %1937 = vmatprep.subr.mxu0 0.0
    %1938 = vmatpush1.msra.mxu0 0.0
    %1939 = vmatprep.subr.mxu0 0.0
    %1940 = vmatpush1.msra.mxu0 0.0
    %1941 = vmatprep.subr.mxu0 0.0
    %1942 = vmatpush1.msra.mxu0 0.0
    %1943 = vmatprep.mubr.f32.mxu0 0.0
    %1944 = vmatmul.mubr.f32.gmra.mrb[0].mxu0 %v178
    %v1945 = vpop.f32.mrb[0].mxu0
    %v1946 = vadd.f32 0.0, %v1945
    %v1947 = vpop.f32.mrb[0].mxu0
    %1948 = vmatprep.mubr.f32.mxu0 0.0
    %1949 = vmatmul.mubr.f32.gmra.mrb[0].mxu0 %v181
    %v1950 = vpop.f32.mrb[0].mxu0
    %v1951 = vadd.f32 0.0, %v1950
    %v1952 = vpop.f32.mrb[0].mxu0
    %1953 = vmatprep.mubr.f32.mxu0 0.0
    %1954 = vmatmul.mubr.f32.gmra.mrb[0].mxu0 %v184
    %v1955 = vpop.f32.mrb[0].mxu0
    %v1956 = vadd.f32 0.0, %v1955
    %v1957 = vpop.f32.mrb[0].mxu0
    %1958 = vmatprep.mubr.f32.mxu0 0.0
    %1959 = vmatmul.mubr.f32.gmra.mrb[0].mxu0 %v187
    %v1960 = vpop.f32.mrb[0].mxu0
    %v1961 = vadd.f32 0.0, %v1960
    %v1962 = vpop.f32.mrb[0].mxu0
    %1963 = vdwg.mxu0
    %v1964 = vmul.f32 %v1946, 2.0
    %v1965 = vmul.f32 %v1951, 2.0
    %v1966 = vmul.f32 %v1956, 2.0
    %v1967 = vmul.f32 %v1961, 2.0
    %v1968 = vsub.f32 %v1964, %v1790
    %v1969 = vsub.f32 %v1965, %v1791
    %v1970 = vsub.f32 %v1966, %v1792
    %v1971 = vsub.f32 %v1967, %v1793
    %1976 = vrot.lane.b32.xlu0 %v1861, 32
    %v1977 = vpop.permute.xlu0 %1976
    %1978 = vrot.lane.b32.xlu0 %v1866, 32
    %v1979 = vpop.permute.xlu0 %1978
    %1980 = vrot.lane.b32.xlu0 %v1871, 32
    %v1981 = vpop.permute.xlu0 %1980
    %1982 = vrot.lane.b32.xlu0 %v1876, 32
    %v1983 = vpop.permute.xlu0 %1982
    %1992 = vrot.lane.b32.xlu0 %v1968, 64
    %v1993 = vpop.permute.xlu0 %1992
    %1994 = vrot.lane.b32.xlu0 %v1969, 64
    %v1995 = vpop.permute.xlu0 %1994
    %1996 = vrot.lane.b32.xlu0 %v1970, 64
    %v1997 = vpop.permute.xlu0 %1996
    %1998 = vrot.lane.b32.xlu0 %v1971, 64
    %v1999 = vpop.permute.xlu0 %1998
    %v2004 = vsel %vm176, %v1790, %v1977
    %v2005 = vsel %vm176, %v1791, %v1979
    %v2006 = vsel %vm176, %v1792, %v1981
    %v2007 = vsel %vm176, %v1793, %v1983
    %v2008 = vsel %vm933, %v2004, %v1993
    %v2009 = vsel %vm933, %v2005, %v1995
    %v2010 = vsel %vm933, %v2006, %v1997
    %v2011 = vsel %vm933, %v2007, %v1999
    %v2012 = vsel %vm600, %v2008, 0.0
    %v2013 = vsel %vm600, %v2009, 0.0
    %v2014 = vsel %vm600, %v2010, 0.0
    %v2015 = vsel %vm600, %v2011, 0.0
    %v2016 = vmul.f32 %v47, %v2012
    %v2017 = vmul.f32 %v52, %v2013
    %v2018 = vmul.f32 %v57, %v2014
    %v2019 = vmul.f32 %v62, %v2015
    %2020 = vst [vmem:[#allocation2] sm:$0xff] %v2016
    %2021 = vst [vmem:[#allocation2 + $0x40] sm:$0xff] %v2017
    %2022 = vst [vmem:[#allocation2 + $0x80] sm:$0xff] %v2018
    %2023 = vst [vmem:[#allocation2 + $0xc0] sm:$0xff] %v2019
    %v2024 = vmul.f32 %v66, %v2012
    %v2025 = vmul.f32 %v70, %v2013
    %v2026 = vmul.f32 %v74, %v2014
    %v2027 = vmul.f32 %v78, %v2015
    %2028 = vst [vmem:[#allocation2 + $0x8] sm:$0xff] %v2024
    %2029 = vst [vmem:[#allocation2 + $0x48] sm:$0xff] %v2025
    %2030 = vst [vmem:[#allocation2 + $0x88] sm:$0xff] %v2026
    %2031 = vst [vmem:[#allocation2 + $0xc8] sm:$0xff] %v2027
    %v2032 = vmul.f32 %v82, %v2012
    %v2033 = vmul.f32 %v86, %v2013
    %v2034 = vmul.f32 %v90, %v2014
    %v2035 = vmul.f32 %v94, %v2015
    %2036 = vst [vmem:[#allocation2 + $0x10] sm:$0xff] %v2032
    %2037 = vst [vmem:[#allocation2 + $0x50] sm:$0xff] %v2033
    %2038 = vst [vmem:[#allocation2 + $0x90] sm:$0xff] %v2034
    %2039 = vst [vmem:[#allocation2 + $0xd0] sm:$0xff] %v2035
    %v2040 = vmul.f32 %v98, %v2012
    %v2041 = vmul.f32 %v102, %v2013
    %v2042 = vmul.f32 %v106, %v2014
    %v2043 = vmul.f32 %v110, %v2015
    %2044 = vst [vmem:[#allocation2 + $0x18] sm:$0xff] %v2040
    %2045 = vst [vmem:[#allocation2 + $0x58] sm:$0xff] %v2041
    %2046 = vst [vmem:[#allocation2 + $0x98] sm:$0xff] %v2042
    %2047 = vst [vmem:[#allocation2 + $0xd8] sm:$0xff] %v2043
    %v2048 = vmul.f32 %v114, %v2012
    %v2049 = vmul.f32 %v118, %v2013
    %v2050 = vmul.f32 %v122, %v2014
    %v2051 = vmul.f32 %v126, %v2015
    %2052 = vst [vmem:[#allocation2 + $0x20] sm:$0xff] %v2048
    %2053 = vst [vmem:[#allocation2 + $0x60] sm:$0xff] %v2049
    %2054 = vst [vmem:[#allocation2 + $0xa0] sm:$0xff] %v2050
    %2055 = vst [vmem:[#allocation2 + $0xe0] sm:$0xff] %v2051
    %v2056 = vmul.f32 %v130, %v2012
    %v2057 = vmul.f32 %v134, %v2013
    %v2058 = vmul.f32 %v138, %v2014
    %v2059 = vmul.f32 %v142, %v2015
    %2060 = vst [vmem:[#allocation2 + $0x28] sm:$0xff] %v2056
    %2061 = vst [vmem:[#allocation2 + $0x68] sm:$0xff] %v2057
    %2062 = vst [vmem:[#allocation2 + $0xa8] sm:$0xff] %v2058
    %2063 = vst [vmem:[#allocation2 + $0xe8] sm:$0xff] %v2059
    %v2064 = vmul.f32 %v146, %v2012
    %v2065 = vmul.f32 %v150, %v2013
    %v2066 = vmul.f32 %v154, %v2014
    %v2067 = vmul.f32 %v158, %v2015
    %2068 = vst [vmem:[#allocation2 + $0x30] sm:$0xff] %v2064
    %2069 = vst [vmem:[#allocation2 + $0x70] sm:$0xff] %v2065
    %2070 = vst [vmem:[#allocation2 + $0xb0] sm:$0xff] %v2066
    %2071 = vst [vmem:[#allocation2 + $0xf0] sm:$0xff] %v2067
    %v2072 = vmul.f32 %v162, %v2012
    %v2073 = vmul.f32 %v166, %v2013
    %v2074 = vmul.f32 %v170, %v2014
    %v2075 = vmul.f32 %v174, %v2015
    %2076 = vst [vmem:[#allocation2 + $0x38] sm:$0xff] %v2072
    %2077 = vst [vmem:[#allocation2 + $0x78] sm:$0xff] %v2073
    %2078 = vst [vmem:[#allocation2 + $0xb8] sm:$0xff] %v2074
    %2079 = vst [vmem:[#allocation2 + $0xf8] sm:$0xff] %v2075
    %v2080 = vld [vmem:[#allocation2] sm:$0xff]
    %v2081 = vld [vmem:[#allocation2 + $0x8] sm:$0xff]
    %v2082 = vld [vmem:[#allocation2 + $0x10] sm:$0xff]
    %v2083 = vld [vmem:[#allocation2 + $0x18] sm:$0xff]
    %v2084 = vld [vmem:[#allocation2 + $0x20] sm:$0xff]
    %v2085 = vld [vmem:[#allocation2 + $0x28] sm:$0xff]
    %v2086 = vld [vmem:[#allocation2 + $0x30] sm:$0xff]
    %v2087 = vld [vmem:[#allocation2 + $0x38] sm:$0xff]
    %v2088 = vld [vmem:[#allocation2 + $0x40] sm:$0xff]
    %v2089 = vld [vmem:[#allocation2 + $0x48] sm:$0xff]
    %v2090 = vld [vmem:[#allocation2 + $0x50] sm:$0xff]
    %v2091 = vld [vmem:[#allocation2 + $0x58] sm:$0xff]
    %v2092 = vld [vmem:[#allocation2 + $0x60] sm:$0xff]
    %v2093 = vld [vmem:[#allocation2 + $0x68] sm:$0xff]
    %v2094 = vld [vmem:[#allocation2 + $0x70] sm:$0xff]
    %v2095 = vld [vmem:[#allocation2 + $0x78] sm:$0xff]
    %v2096 = vld [vmem:[#allocation2 + $0x80] sm:$0xff]
    %v2097 = vld [vmem:[#allocation2 + $0x88] sm:$0xff]
    %v2098 = vld [vmem:[#allocation2 + $0x90] sm:$0xff]
    %v2099 = vld [vmem:[#allocation2 + $0x98] sm:$0xff]
    %v2100 = vld [vmem:[#allocation2 + $0xa0] sm:$0xff]
    %v2101 = vld [vmem:[#allocation2 + $0xa8] sm:$0xff]
    %v2102 = vld [vmem:[#allocation2 + $0xb0] sm:$0xff]
    %v2103 = vld [vmem:[#allocation2 + $0xb8] sm:$0xff]
    %v2104 = vld [vmem:[#allocation2 + $0xc0] sm:$0xff]
    %v2105 = vld [vmem:[#allocation2 + $0xc8] sm:$0xff]
    %v2106 = vld [vmem:[#allocation2 + $0xd0] sm:$0xff]
    %v2107 = vld [vmem:[#allocation2 + $0xd8] sm:$0xff]
    %v2108 = vld [vmem:[#allocation2 + $0xe0] sm:$0xff]
    %v2109 = vld [vmem:[#allocation2 + $0xe8] sm:$0xff]
    %v2110 = vld [vmem:[#allocation2 + $0xf0] sm:$0xff]
    %v2111 = vld [vmem:[#allocation2 + $0xf8] sm:$0xff]
    %v2112 = vld [vmem:[%s6] sm:$0xf]
    %v2113 = vld [vmem:[%s6 + $0x4] sm:$0xf]
    %v2114 = vld [vmem:[%s6 + $0x8] sm:$0xf]
    %v2115 = vld [vmem:[%s6 + $0xc] sm:$0xf]
    %v2116 = vld [vmem:[%s6 + $0x10] sm:$0xf]
    %v2117 = vld [vmem:[%s6 + $0x14] sm:$0xf]
    %v2118 = vld [vmem:[%s6 + $0x18] sm:$0xf]
    %v2119 = vld [vmem:[%s6 + $0x1c] sm:$0xf]
    %v2120 = vld [vmem:[%s6 + $0x20] sm:$0xf]
    %v2121 = vld [vmem:[%s6 + $0x24] sm:$0xf]
    %v2122 = vld [vmem:[%s6 + $0x28] sm:$0xf]
    %v2123 = vld [vmem:[%s6 + $0x2c] sm:$0xf]
    %v2124 = vld [vmem:[%s6 + $0x30] sm:$0xf]
    %v2125 = vld [vmem:[%s6 + $0x34] sm:$0xf]
    %v2126 = vld [vmem:[%s6 + $0x38] sm:$0xf]
    %v2127 = vld [vmem:[%s6 + $0x3c] sm:$0xf]
    %v2128 = vld [vmem:[%s6 + $0x40] sm:$0xf]
    %v2129 = vld [vmem:[%s6 + $0x44] sm:$0xf]
    %v2130 = vld [vmem:[%s6 + $0x48] sm:$0xf]
    %v2131 = vld [vmem:[%s6 + $0x4c] sm:$0xf]
    %v2132 = vld [vmem:[%s6 + $0x50] sm:$0xf]
    %v2133 = vld [vmem:[%s6 + $0x54] sm:$0xf]
    %v2134 = vld [vmem:[%s6 + $0x58] sm:$0xf]
    %v2135 = vld [vmem:[%s6 + $0x5c] sm:$0xf]
    %v2136 = vld [vmem:[%s6 + $0x60] sm:$0xf]
    %v2137 = vld [vmem:[%s6 + $0x64] sm:$0xf]
    %v2138 = vld [vmem:[%s6 + $0x68] sm:$0xf]
    %v2139 = vld [vmem:[%s6 + $0x6c] sm:$0xf]
    %v2140 = vld [vmem:[%s6 + $0x70] sm:$0xf]
    %v2141 = vld [vmem:[%s6 + $0x74] sm:$0xf]
    %v2142 = vld [vmem:[%s6 + $0x78] sm:$0xf]
    %v2143 = vld [vmem:[%s6 + $0x7c] sm:$0xf]
    %v2144 = vld [vmem:[%s6 + $0x80] sm:$0xf]
    %v2145 = vld [vmem:[%s6 + $0x84] sm:$0xf]
    %v2146 = vld [vmem:[%s6 + $0x88] sm:$0xf]
    %v2147 = vld [vmem:[%s6 + $0x8c] sm:$0xf]
    %v2148 = vld [vmem:[%s6 + $0x90] sm:$0xf]
    %v2149 = vld [vmem:[%s6 + $0x94] sm:$0xf]
    %v2150 = vld [vmem:[%s6 + $0x98] sm:$0xf]
    %v2151 = vld [vmem:[%s6 + $0x9c] sm:$0xf]
    %v2152 = vld [vmem:[%s6 + $0xa0] sm:$0xf]
    %v2153 = vld [vmem:[%s6 + $0xa4] sm:$0xf]
    %v2154 = vld [vmem:[%s6 + $0xa8] sm:$0xf]
    %v2155 = vld [vmem:[%s6 + $0xac] sm:$0xf]
    %v2156 = vld [vmem:[%s6 + $0xb0] sm:$0xf]
    %v2157 = vld [vmem:[%s6 + $0xb4] sm:$0xf]
    %v2158 = vld [vmem:[%s6 + $0xb8] sm:$0xf]
    %v2159 = vld [vmem:[%s6 + $0xbc] sm:$0xf]
    %v2160 = vld [vmem:[%s6 + $0xc0] sm:$0xf]
    %v2161 = vld [vmem:[%s6 + $0xc4] sm:$0xf]
    %v2162 = vld [vmem:[%s6 + $0xc8] sm:$0xf]
    %v2163 = vld [vmem:[%s6 + $0xcc] sm:$0xf]
    %v2164 = vld [vmem:[%s6 + $0xd0] sm:$0xf]
    %v2165 = vld [vmem:[%s6 + $0xd4] sm:$0xf]
    %v2166 = vld [vmem:[%s6 + $0xd8] sm:$0xf]
    %v2167 = vld [vmem:[%s6 + $0xdc] sm:$0xf]
    %v2168 = vld [vmem:[%s6 + $0xe0] sm:$0xf]
    %v2169 = vld [vmem:[%s6 + $0xe4] sm:$0xf]
    %v2170 = vld [vmem:[%s6 + $0xe8] sm:$0xf]
    %v2171 = vld [vmem:[%s6 + $0xec] sm:$0xf]
    %v2172 = vld [vmem:[%s6 + $0xf0] sm:$0xf]
    %v2173 = vld [vmem:[%s6 + $0xf4] sm:$0xf]
    %v2174 = vld [vmem:[%s6 + $0xf8] sm:$0xf]
    %v2175 = vld [vmem:[%s6 + $0xfc] sm:$0xf]
    %v2176 = vld [vmem:[%s6 + $0x100] sm:$0xf]
    %v2177 = vld [vmem:[%s6 + $0x104] sm:$0xf]
    %v2178 = vld [vmem:[%s6 + $0x108] sm:$0xf]
    %v2179 = vld [vmem:[%s6 + $0x10c] sm:$0xf]
    %v2180 = vld [vmem:[%s6 + $0x110] sm:$0xf]
    %v2181 = vld [vmem:[%s6 + $0x114] sm:$0xf]
    %v2182 = vld [vmem:[%s6 + $0x118] sm:$0xf]
    %v2183 = vld [vmem:[%s6 + $0x11c] sm:$0xf]
    %v2184 = vld [vmem:[%s6 + $0x120] sm:$0xf]
    %v2185 = vld [vmem:[%s6 + $0x124] sm:$0xf]
    %v2186 = vld [vmem:[%s6 + $0x128] sm:$0xf]
    %v2187 = vld [vmem:[%s6 + $0x12c] sm:$0xf]
    %v2188 = vld [vmem:[%s6 + $0x130] sm:$0xf]
    %v2189 = vld [vmem:[%s6 + $0x134] sm:$0xf]
    %v2190 = vld [vmem:[%s6 + $0x138] sm:$0xf]
    %v2191 = vld [vmem:[%s6 + $0x13c] sm:$0xf]
    %v2192 = vld [vmem:[%s6 + $0x140] sm:$0xf]
    %v2193 = vld [vmem:[%s6 + $0x144] sm:$0xf]
    %v2194 = vld [vmem:[%s6 + $0x148] sm:$0xf]
    %v2195 = vld [vmem:[%s6 + $0x14c] sm:$0xf]
    %v2196 = vld [vmem:[%s6 + $0x150] sm:$0xf]
    %v2197 = vld [vmem:[%s6 + $0x154] sm:$0xf]
    %v2198 = vld [vmem:[%s6 + $0x158] sm:$0xf]
    %v2199 = vld [vmem:[%s6 + $0x15c] sm:$0xf]
    %v2200 = vld [vmem:[%s6 + $0x160] sm:$0xf]
    %v2201 = vld [vmem:[%s6 + $0x164] sm:$0xf]
    %v2202 = vld [vmem:[%s6 + $0x168] sm:$0xf]
    %v2203 = vld [vmem:[%s6 + $0x16c] sm:$0xf]
    %v2204 = vld [vmem:[%s6 + $0x170] sm:$0xf]
    %v2205 = vld [vmem:[%s6 + $0x174] sm:$0xf]
    %v2206 = vld [vmem:[%s6 + $0x178] sm:$0xf]
    %v2207 = vld [vmem:[%s6 + $0x17c] sm:$0xf]
    %v2208 = vld [vmem:[%s6 + $0x180] sm:$0xf]
    %v2209 = vld [vmem:[%s6 + $0x184] sm:$0xf]
    %v2210 = vld [vmem:[%s6 + $0x188] sm:$0xf]
    %v2211 = vld [vmem:[%s6 + $0x18c] sm:$0xf]
    %v2212 = vld [vmem:[%s6 + $0x190] sm:$0xf]
    %v2213 = vld [vmem:[%s6 + $0x194] sm:$0xf]
    %v2214 = vld [vmem:[%s6 + $0x198] sm:$0xf]
    %v2215 = vld [vmem:[%s6 + $0x19c] sm:$0xf]
    %v2216 = vld [vmem:[%s6 + $0x1a0] sm:$0xf]
    %v2217 = vld [vmem:[%s6 + $0x1a4] sm:$0xf]
    %v2218 = vld [vmem:[%s6 + $0x1a8] sm:$0xf]
    %v2219 = vld [vmem:[%s6 + $0x1ac] sm:$0xf]
    %v2220 = vld [vmem:[%s6 + $0x1b0] sm:$0xf]
    %v2221 = vld [vmem:[%s6 + $0x1b4] sm:$0xf]
    %v2222 = vld [vmem:[%s6 + $0x1b8] sm:$0xf]
    %v2223 = vld [vmem:[%s6 + $0x1bc] sm:$0xf]
    %v2224 = vld [vmem:[%s6 + $0x1c0] sm:$0xf]
    %v2225 = vld [vmem:[%s6 + $0x1c4] sm:$0xf]
    %v2226 = vld [vmem:[%s6 + $0x1c8] sm:$0xf]
    %v2227 = vld [vmem:[%s6 + $0x1cc] sm:$0xf]
    %v2228 = vld [vmem:[%s6 + $0x1d0] sm:$0xf]
    %v2229 = vld [vmem:[%s6 + $0x1d4] sm:$0xf]
    %v2230 = vld [vmem:[%s6 + $0x1d8] sm:$0xf]
    %v2231 = vld [vmem:[%s6 + $0x1dc] sm:$0xf]
    %v2232 = vld [vmem:[%s6 + $0x1e0] sm:$0xf]
    %v2233 = vld [vmem:[%s6 + $0x1e4] sm:$0xf]
    %v2234 = vld [vmem:[%s6 + $0x1e8] sm:$0xf]
    %v2235 = vld [vmem:[%s6 + $0x1ec] sm:$0xf]
    %v2236 = vld [vmem:[%s6 + $0x1f0] sm:$0xf]
    %v2237 = vld [vmem:[%s6 + $0x1f4] sm:$0xf]
    %v2238 = vld [vmem:[%s6 + $0x1f8] sm:$0xf]
    %v2239 = vld [vmem:[%s6 + $0x1fc] sm:$0xf]
    %v2240 = vpack.c.bf16 %v2088, %v2080
    %v2241 = vpack.c.bf16 %v2089, %v2081
    %v2242 = vpack.c.bf16 %v2090, %v2082
    %v2243 = vpack.c.bf16 %v2091, %v2083
    %v2244 = vpack.c.bf16 %v2092, %v2084
    %v2245 = vpack.c.bf16 %v2093, %v2085
    %v2246 = vpack.c.bf16 %v2094, %v2086
    %v2247 = vpack.c.bf16 %v2095, %v2087
    %v2248 = vpack.c.bf16 %v2104, %v2096
    %v2249 = vpack.c.bf16 %v2105, %v2097
    %v2250 = vpack.c.bf16 %v2106, %v2098
    %v2251 = vpack.c.bf16 %v2107, %v2099
    %v2252 = vpack.c.bf16 %v2108, %v2100
    %v2253 = vpack.c.bf16 %v2109, %v2101
    %v2254 = vpack.c.bf16 %v2110, %v2102
    %v2255 = vpack.c.bf16 %v2111, %v2103
    %v2384 = vunpack.c.l.b16 %v2112
    %v2385 = vunpack.c.l.b16 %v2113
    %v2386 = vunpack.c.l.b16 %v2114
    %v2387 = vunpack.c.l.b16 %v2115
    %v2388 = vunpack.c.l.b16 %v2116
    %v2389 = vunpack.c.l.b16 %v2117
    %v2390 = vunpack.c.l.b16 %v2118
    %v2391 = vunpack.c.l.b16 %v2119
    %v2392 = vunpack.c.l.b16 %v2120
    %v2393 = vunpack.c.l.b16 %v2121
    %v2394 = vunpack.c.l.b16 %v2122
    %v2395 = vunpack.c.l.b16 %v2123
    %v2396 = vunpack.c.l.b16 %v2124
    %v2397 = vunpack.c.l.b16 %v2125
    %v2398 = vunpack.c.l.b16 %v2126
    %v2399 = vunpack.c.l.b16 %v2127
    %v2400 = vunpack.c.l.b16 %v2128
    %v2401 = vunpack.c.l.b16 %v2129
    %v2402 = vunpack.c.l.b16 %v2130
    %v2403 = vunpack.c.l.b16 %v2131
    %v2404 = vunpack.c.l.b16 %v2132
    %v2405 = vunpack.c.l.b16 %v2133
    %v2406 = vunpack.c.l.b16 %v2134
    %v2407 = vunpack.c.l.b16 %v2135
    %v2408 = vunpack.c.l.b16 %v2136
    %v2409 = vunpack.c.l.b16 %v2137
    %v2410 = vunpack.c.l.b16 %v2138
    %v2411 = vunpack.c.l.b16 %v2139
    %v2412 = vunpack.c.l.b16 %v2140
    %v2413 = vunpack.c.l.b16 %v2141
    %v2414 = vunpack.c.l.b16 %v2142
    %v2415 = vunpack.c.l.b16 %v2143
    %v2416 = vunpack.c.l.b16 %v2144
    %v2417 = vunpack.c.l.b16 %v2145
    %v2418 = vunpack.c.l.b16 %v2146
    %v2419 = vunpack.c.l.b16 %v2147
    %v2420 = vunpack.c.l.b16 %v2148
    %v2421 = vunpack.c.l.b16 %v2149
    %v2422 = vunpack.c.l.b16 %v2150
    %v2423 = vunpack.c.l.b16 %v2151
    %v2424 = vunpack.c.l.b16 %v2152
    %v2425 = vunpack.c.l.b16 %v2153
    %v2426 = vunpack.c.l.b16 %v2154
    %v2427 = vunpack.c.l.b16 %v2155
    %v2428 = vunpack.c.l.b16 %v2156
    %v2429 = vunpack.c.l.b16 %v2157
    %v2430 = vunpack.c.l.b16 %v2158
    %v2431 = vunpack.c.l.b16 %v2159
    %v2432 = vunpack.c.l.b16 %v2160
    %v2433 = vunpack.c.l.b16 %v2161
    %v2434 = vunpack.c.l.b16 %v2162
    %v2435 = vunpack.c.l.b16 %v2163
    %v2436 = vunpack.c.l.b16 %v2164
    %v2437 = vunpack.c.l.b16 %v2165
    %v2438 = vunpack.c.l.b16 %v2166
    %v2439 = vunpack.c.l.b16 %v2167
    %v2440 = vunpack.c.l.b16 %v2168
    %v2441 = vunpack.c.l.b16 %v2169
    %v2442 = vunpack.c.l.b16 %v2170
    %v2443 = vunpack.c.l.b16 %v2171
    %v2444 = vunpack.c.l.b16 %v2172
    %v2445 = vunpack.c.l.b16 %v2173
    %v2446 = vunpack.c.l.b16 %v2174
    %v2447 = vunpack.c.l.b16 %v2175
    %v2448 = vunpack.c.l.b16 %v2176
    %v2449 = vunpack.c.l.b16 %v2177
    %v2450 = vunpack.c.l.b16 %v2178
    %v2451 = vunpack.c.l.b16 %v2179
    %v2452 = vunpack.c.l.b16 %v2180
    %v2453 = vunpack.c.l.b16 %v2181
    %v2454 = vunpack.c.l.b16 %v2182
    %v2455 = vunpack.c.l.b16 %v2183
    %v2456 = vunpack.c.l.b16 %v2184
    %v2457 = vunpack.c.l.b16 %v2185
    %v2458 = vunpack.c.l.b16 %v2186
    %v2459 = vunpack.c.l.b16 %v2187
    %v2460 = vunpack.c.l.b16 %v2188
    %v2461 = vunpack.c.l.b16 %v2189
    %v2462 = vunpack.c.l.b16 %v2190
    %v2463 = vunpack.c.l.b16 %v2191
    %v2464 = vunpack.c.l.b16 %v2192
    %v2465 = vunpack.c.l.b16 %v2193
    %v2466 = vunpack.c.l.b16 %v2194
    %v2467 = vunpack.c.l.b16 %v2195
    %v2468 = vunpack.c.l.b16 %v2196
    %v2469 = vunpack.c.l.b16 %v2197
    %v2470 = vunpack.c.l.b16 %v2198
    %v2471 = vunpack.c.l.b16 %v2199
    %v2472 = vunpack.c.l.b16 %v2200
    %v2473 = vunpack.c.l.b16 %v2201
    %v2474 = vunpack.c.l.b16 %v2202
    %v2475 = vunpack.c.l.b16 %v2203
    %v2476 = vunpack.c.l.b16 %v2204
    %v2477 = vunpack.c.l.b16 %v2205
    %v2478 = vunpack.c.l.b16 %v2206
    %v2479 = vunpack.c.l.b16 %v2207
    %v2480 = vunpack.c.l.b16 %v2208
    %v2481 = vunpack.c.l.b16 %v2209
    %v2482 = vunpack.c.l.b16 %v2210
    %v2483 = vunpack.c.l.b16 %v2211
    %v2484 = vunpack.c.l.b16 %v2212
    %v2485 = vunpack.c.l.b16 %v2213
    %v2486 = vunpack.c.l.b16 %v2214
    %v2487 = vunpack.c.l.b16 %v2215
    %v2488 = vunpack.c.l.b16 %v2216
    %v2489 = vunpack.c.l.b16 %v2217
    %v2490 = vunpack.c.l.b16 %v2218
    %v2491 = vunpack.c.l.b16 %v2219
    %v2492 = vunpack.c.l.b16 %v2220
    %v2493 = vunpack.c.l.b16 %v2221
    %v2494 = vunpack.c.l.b16 %v2222
    %v2495 = vunpack.c.l.b16 %v2223
    %v2496 = vunpack.c.l.b16 %v2224
    %v2497 = vunpack.c.l.b16 %v2225
    %v2498 = vunpack.c.l.b16 %v2226
    %v2499 = vunpack.c.l.b16 %v2227
    %v2500 = vunpack.c.l.b16 %v2228
    %v2501 = vunpack.c.l.b16 %v2229
    %v2502 = vunpack.c.l.b16 %v2230
    %v2503 = vunpack.c.l.b16 %v2231
    %v2504 = vunpack.c.l.b16 %v2232
    %v2505 = vunpack.c.l.b16 %v2233
    %v2506 = vunpack.c.l.b16 %v2234
    %v2507 = vunpack.c.l.b16 %v2235
    %v2508 = vunpack.c.l.b16 %v2236
    %v2509 = vunpack.c.l.b16 %v2237
    %v2510 = vunpack.c.l.b16 %v2238
    %v2511 = vunpack.c.l.b16 %v2239
    %v2512 = vpack.c.b16 %v2385, %v2384
    %v2513 = vpack.c.b16 %v2387, %v2386
    %v2514 = vpack.c.b16 %v2389, %v2388
    %v2515 = vpack.c.b16 %v2391, %v2390
    %v2516 = vpack.c.b16 %v2393, %v2392
    %v2517 = vpack.c.b16 %v2395, %v2394
    %v2518 = vpack.c.b16 %v2397, %v2396
    %v2519 = vpack.c.b16 %v2399, %v2398
    %v2520 = vpack.c.b16 %v2401, %v2400
    %v2521 = vpack.c.b16 %v2403, %v2402
    %v2522 = vpack.c.b16 %v2405, %v2404
    %v2523 = vpack.c.b16 %v2407, %v2406
    %v2524 = vpack.c.b16 %v2409, %v2408
    %v2525 = vpack.c.b16 %v2411, %v2410
    %v2526 = vpack.c.b16 %v2413, %v2412
    %v2527 = vpack.c.b16 %v2415, %v2414
    %v2528 = vpack.c.b16 %v2417, %v2416
    %v2529 = vpack.c.b16 %v2419, %v2418
    %v2530 = vpack.c.b16 %v2421, %v2420
    %v2531 = vpack.c.b16 %v2423, %v2422
    %v2532 = vpack.c.b16 %v2425, %v2424
    %v2533 = vpack.c.b16 %v2427, %v2426
    %v2534 = vpack.c.b16 %v2429, %v2428
    %v2535 = vpack.c.b16 %v2431, %v2430
    %v2536 = vpack.c.b16 %v2433, %v2432
    %v2537 = vpack.c.b16 %v2435, %v2434
    %v2538 = vpack.c.b16 %v2437, %v2436
    %v2539 = vpack.c.b16 %v2439, %v2438
    %v2540 = vpack.c.b16 %v2441, %v2440
    %v2541 = vpack.c.b16 %v2443, %v2442
    %v2542 = vpack.c.b16 %v2445, %v2444
    %v2543 = vpack.c.b16 %v2447, %v2446
    %v2544 = vpack.c.b16 %v2449, %v2448
    %v2545 = vpack.c.b16 %v2451, %v2450
    %v2546 = vpack.c.b16 %v2453, %v2452
    %v2547 = vpack.c.b16 %v2455, %v2454
    %v2548 = vpack.c.b16 %v2457, %v2456
    %v2549 = vpack.c.b16 %v2459, %v2458
    %v2550 = vpack.c.b16 %v2461, %v2460
    %v2551 = vpack.c.b16 %v2463, %v2462
    %v2552 = vpack.c.b16 %v2465, %v2464
    %v2553 = vpack.c.b16 %v2467, %v2466
    %v2554 = vpack.c.b16 %v2469, %v2468
    %v2555 = vpack.c.b16 %v2471, %v2470
    %v2556 = vpack.c.b16 %v2473, %v2472
    %v2557 = vpack.c.b16 %v2475, %v2474
    %v2558 = vpack.c.b16 %v2477, %v2476
    %v2559 = vpack.c.b16 %v2479, %v2478
    %v2560 = vpack.c.b16 %v2481, %v2480
    %v2561 = vpack.c.b16 %v2483, %v2482
    %v2562 = vpack.c.b16 %v2485, %v2484
    %v2563 = vpack.c.b16 %v2487, %v2486
    %v2564 = vpack.c.b16 %v2489, %v2488
    %v2565 = vpack.c.b16 %v2491, %v2490
    %v2566 = vpack.c.b16 %v2493, %v2492
    %v2567 = vpack.c.b16 %v2495, %v2494
    %v2568 = vpack.c.b16 %v2497, %v2496
    %v2569 = vpack.c.b16 %v2499, %v2498
    %v2570 = vpack.c.b16 %v2501, %v2500
    %v2571 = vpack.c.b16 %v2503, %v2502
    %v2572 = vpack.c.b16 %v2505, %v2504
    %v2573 = vpack.c.b16 %v2507, %v2506
    %v2574 = vpack.c.b16 %v2509, %v2508
    %v2575 = vpack.c.b16 %v2511, %v2510
    %2640 = vmatprep.subr.bf16.mxu0 0
    %2641 = vmatpush1.bf16.msra.mxu0 %v2512
    %2642 = vmatprep.subr.bf16.mxu0 0
    %2643 = vmatpush1.bf16.msra.mxu0 %v2513
    %2644 = vmatprep.subr.bf16.mxu0 0
    %2645 = vmatpush1.bf16.msra.mxu0 %v2514
    %2646 = vmatprep.subr.bf16.mxu0 0
    %2647 = vmatpush1.bf16.msra.mxu0 %v2515
    %2648 = vmatprep.subr.bf16.mxu0 0
    %2649 = vmatpush1.bf16.msra.mxu0 %v2516
    %2650 = vmatprep.subr.bf16.mxu0 0
    %2651 = vmatpush1.bf16.msra.mxu0 %v2517
    %2652 = vmatprep.subr.bf16.mxu0 0
    %2653 = vmatpush1.bf16.msra.mxu0 %v2518
    %2654 = vmatprep.subr.bf16.mxu0 0
    %2655 = vmatpush1.bf16.msra.mxu0 %v2519
    %2656 = vmatprep.subr.bf16.mxu0 0
    %2657 = vmatpush1.bf16.msra.mxu0 %v2520
    %2658 = vmatprep.subr.bf16.mxu0 0
    %2659 = vmatpush1.bf16.msra.mxu0 %v2521
    %2660 = vmatprep.subr.bf16.mxu0 0
    %2661 = vmatpush1.bf16.msra.mxu0 %v2522
    %2662 = vmatprep.subr.bf16.mxu0 0
    %2663 = vmatpush1.bf16.msra.mxu0 %v2523
    %2664 = vmatprep.subr.bf16.mxu0 0
    %2665 = vmatpush1.bf16.msra.mxu0 %v2524
    %2666 = vmatprep.subr.bf16.mxu0 0
    %2667 = vmatpush1.bf16.msra.mxu0 %v2525
    %2668 = vmatprep.subr.bf16.mxu0 0
    %2669 = vmatpush1.bf16.msra.mxu0 %v2526
    %2670 = vmatprep.subr.bf16.mxu0 0
    %2671 = vmatpush1.bf16.msra.mxu0 %v2527
    %2672 = vmatprep.mubr.bf16.mxu0 %v2241
    %2673 = vmatmul.mubr.bf16.gmra.mrb[0].mxu0 %v2240
    %v2674 = vpop.f32.mrb[0].mxu0
    %v2675 = vadd.f32 0.0, %v2674
    %v2676 = vpop.f32.mrb[0].mxu0
    %v2677 = vpop.f32.mrb[0].mxu0
    %v2678 = vadd.f32 0.0, %v2677
    %v2679 = vpop.f32.mrb[0].mxu0
    %2680 = vmatprep.mubr.bf16.mxu0 %v2249
    %2681 = vmatmul.mubr.bf16.gmra.mrb[0].mxu0 %v2248
    %v2682 = vpop.f32.mrb[0].mxu0
    %v2683 = vadd.f32 0.0, %v2682
    %v2684 = vpop.f32.mrb[0].mxu0
    %v2685 = vpop.f32.mrb[0].mxu0
    %v2686 = vadd.f32 0.0, %v2685
    %v2687 = vpop.f32.mrb[0].mxu0
    %2688 = vdwg.mxu0
    %2689 = vmatprep.subr.bf16.mxu0 0
    %2690 = vmatpush1.bf16.msra.mxu0 %v2528
    %2691 = vmatprep.subr.bf16.mxu0 0
    %2692 = vmatpush1.bf16.msra.mxu0 %v2529
    %2693 = vmatprep.subr.bf16.mxu0 0
    %2694 = vmatpush1.bf16.msra.mxu0 %v2530
    %2695 = vmatprep.subr.bf16.mxu0 0
    %2696 = vmatpush1.bf16.msra.mxu0 %v2531
    %2697 = vmatprep.subr.bf16.mxu0 0
    %2698 = vmatpush1.bf16.msra.mxu0 %v2532
    %2699 = vmatprep.subr.bf16.mxu0 0
    %2700 = vmatpush1.bf16.msra.mxu0 %v2533
    %2701 = vmatprep.subr.bf16.mxu0 0
    %2702 = vmatpush1.bf16.msra.mxu0 %v2534
    %2703 = vmatprep.subr.bf16.mxu0 0
    %2704 = vmatpush1.bf16.msra.mxu0 %v2535
    %2705 = vmatprep.subr.bf16.mxu0 0
    %2706 = vmatpush1.bf16.msra.mxu0 %v2536
    %2707 = vmatprep.subr.bf16.mxu0 0
    %2708 = vmatpush1.bf16.msra.mxu0 %v2537
    %2709 = vmatprep.subr.bf16.mxu0 0
    %2710 = vmatpush1.bf16.msra.mxu0 %v2538
    %2711 = vmatprep.subr.bf16.mxu0 0
    %2712 = vmatpush1.bf16.msra.mxu0 %v2539
    %2713 = vmatprep.subr.bf16.mxu0 0
    %2714 = vmatpush1.bf16.msra.mxu0 %v2540
    %2715 = vmatprep.subr.bf16.mxu0 0
    %2716 = vmatpush1.bf16.msra.mxu0 %v2541
    %2717 = vmatprep.subr.bf16.mxu0 0
    %2718 = vmatpush1.bf16.msra.mxu0 %v2542
    %2719 = vmatprep.subr.bf16.mxu0 0
    %2720 = vmatpush1.bf16.msra.mxu0 %v2543
    %2721 = vmatprep.mubr.bf16.mxu0 %v2243
    %2722 = vmatmul.mubr.bf16.gmra.mrb[0].mxu0 %v2242
    %v2723 = vpop.f32.mrb[0].mxu0
    %v2724 = vadd.f32 %v2675, %v2723
    %v2725 = vpop.f32.mrb[0].mxu0
    %v2726 = vpop.f32.mrb[0].mxu0
    %v2727 = vadd.f32 %v2678, %v2726
    %v2728 = vpop.f32.mrb[0].mxu0
    %2729 = vmatprep.mubr.bf16.mxu0 %v2251
    %2730 = vmatmul.mubr.bf16.gmra.mrb[0].mxu0 %v2250
    %v2731 = vpop.f32.mrb[0].mxu0
    %v2732 = vadd.f32 %v2683, %v2731
    %v2733 = vpop.f32.mrb[0].mxu0
    %v2734 = vpop.f32.mrb[0].mxu0
    %v2735 = vadd.f32 %v2686, %v2734
    %v2736 = vpop.f32.mrb[0].mxu0
    %2737 = vdwg.mxu0
    %2738 = vmatprep.subr.bf16.mxu0 0
    %2739 = vmatpush1.bf16.msra.mxu0 %v2544
    %2740 = vmatprep.subr.bf16.mxu0 0
    %2741 = vmatpush1.bf16.msra.mxu0 %v2545
    %2742 = vmatprep.subr.bf16.mxu0 0
    %2743 = vmatpush1.bf16.msra.mxu0 %v2546
    %2744 = vmatprep.subr.bf16.mxu0 0
    %2745 = vmatpush1.bf16.msra.mxu0 %v2547
    %2746 = vmatprep.subr.bf16.mxu0 0
    %2747 = vmatpush1.bf16.msra.mxu0 %v2548
    %2748 = vmatprep.subr.bf16.mxu0 0
    %2749 = vmatpush1.bf16.msra.mxu0 %v2549
    %2750 = vmatprep.subr.bf16.mxu0 0
    %2751 = vmatpush1.bf16.msra.mxu0 %v2550
    %2752 = vmatprep.subr.bf16.mxu0 0
    %2753 = vmatpush1.bf16.msra.mxu0 %v2551
    %2754 = vmatprep.subr.bf16.mxu0 0
    %2755 = vmatpush1.bf16.msra.mxu0 %v2552
    %2756 = vmatprep.subr.bf16.mxu0 0
    %2757 = vmatpush1.bf16.msra.mxu0 %v2553
    %2758 = vmatprep.subr.bf16.mxu0 0
    %2759 = vmatpush1.bf16.msra.mxu0 %v2554
    %2760 = vmatprep.subr.bf16.mxu0 0
    %2761 = vmatpush1.bf16.msra.mxu0 %v2555
    %2762 = vmatprep.subr.bf16.mxu0 0
    %2763 = vmatpush1.bf16.msra.mxu0 %v2556
    %2764 = vmatprep.subr.bf16.mxu0 0
    %2765 = vmatpush1.bf16.msra.mxu0 %v2557
    %2766 = vmatprep.subr.bf16.mxu0 0
    %2767 = vmatpush1.bf16.msra.mxu0 %v2558
    %2768 = vmatprep.subr.bf16.mxu0 0
    %2769 = vmatpush1.bf16.msra.mxu0 %v2559
    %2770 = vmatprep.mubr.bf16.mxu0 %v2245
    %2771 = vmatmul.mubr.bf16.gmra.mrb[0].mxu0 %v2244
    %v2772 = vpop.f32.mrb[0].mxu0
    %v2773 = vadd.f32 %v2724, %v2772
    %v2774 = vpop.f32.mrb[0].mxu0
    %v2775 = vpop.f32.mrb[0].mxu0
    %v2776 = vadd.f32 %v2727, %v2775
    %v2777 = vpop.f32.mrb[0].mxu0
    %2778 = vmatprep.mubr.bf16.mxu0 %v2253
    %2779 = vmatmul.mubr.bf16.gmra.mrb[0].mxu0 %v2252
    %v2780 = vpop.f32.mrb[0].mxu0
    %v2781 = vadd.f32 %v2732, %v2780
    %v2782 = vpop.f32.mrb[0].mxu0
    %v2783 = vpop.f32.mrb[0].mxu0
    %v2784 = vadd.f32 %v2735, %v2783
    %v2785 = vpop.f32.mrb[0].mxu0
    %2786 = vdwg.mxu0
    %2787 = vmatprep.subr.bf16.mxu0 0
    %2788 = vmatpush1.bf16.msra.mxu0 %v2560
    %2789 = vmatprep.subr.bf16.mxu0 0
    %2790 = vmatpush1.bf16.msra.mxu0 %v2561
    %2791 = vmatprep.subr.bf16.mxu0 0
    %2792 = vmatpush1.bf16.msra.mxu0 %v2562
    %2793 = vmatprep.subr.bf16.mxu0 0
    %2794 = vmatpush1.bf16.msra.mxu0 %v2563
    %2795 = vmatprep.subr.bf16.mxu0 0
    %2796 = vmatpush1.bf16.msra.mxu0 %v2564
    %2797 = vmatprep.subr.bf16.mxu0 0
    %2798 = vmatpush1.bf16.msra.mxu0 %v2565
    %2799 = vmatprep.subr.bf16.mxu0 0
    %2800 = vmatpush1.bf16.msra.mxu0 %v2566
    %2801 = vmatprep.subr.bf16.mxu0 0
    %2802 = vmatpush1.bf16.msra.mxu0 %v2567
    %2803 = vmatprep.subr.bf16.mxu0 0
    %2804 = vmatpush1.bf16.msra.mxu0 %v2568
    %2805 = vmatprep.subr.bf16.mxu0 0
    %2806 = vmatpush1.bf16.msra.mxu0 %v2569
    %2807 = vmatprep.subr.bf16.mxu0 0
    %2808 = vmatpush1.bf16.msra.mxu0 %v2570
    %2809 = vmatprep.subr.bf16.mxu0 0
    %2810 = vmatpush1.bf16.msra.mxu0 %v2571
    %2811 = vmatprep.subr.bf16.mxu0 0
    %2812 = vmatpush1.bf16.msra.mxu0 %v2572
    %2813 = vmatprep.subr.bf16.mxu0 0
    %2814 = vmatpush1.bf16.msra.mxu0 %v2573
    %2815 = vmatprep.subr.bf16.mxu0 0
    %2816 = vmatpush1.bf16.msra.mxu0 %v2574
    %2817 = vmatprep.subr.bf16.mxu0 0
    %2818 = vmatpush1.bf16.msra.mxu0 %v2575
    %2819 = vmatprep.mubr.bf16.mxu0 %v2247
    %2820 = vmatmul.mubr.bf16.gmra.mrb[0].mxu0 %v2246
    %v2821 = vpop.f32.mrb[0].mxu0
    %v2822 = vadd.f32 %v2773, %v2821
    %v2823 = vpop.f32.mrb[0].mxu0
    %v2824 = vpop.f32.mrb[0].mxu0
    %v2825 = vadd.f32 %v2776, %v2824
    %v2826 = vpop.f32.mrb[0].mxu0
    %2827 = vmatprep.mubr.bf16.mxu0 %v2255
    %2828 = vmatmul.mubr.bf16.gmra.mrb[0].mxu0 %v2254
    %v2829 = vpop.f32.mrb[0].mxu0
    %v2830 = vadd.f32 %v2781, %v2829
    %v2831 = vpop.f32.mrb[0].mxu0
    %v2832 = vpop.f32.mrb[0].mxu0
    %v2833 = vadd.f32 %v2784, %v2832
    %v2834 = vpop.f32.mrb[0].mxu0
    %2835 = vdwg.mxu0
    %2840 = vrot.lane.b32.xlu0 %v2822, 64
    %v2841 = vpop.permute.xlu0 %2840
    %2842 = vrot.lane.b32.xlu0 %v2825, 64
    %v2843 = vpop.permute.xlu0 %2842
    %2844 = vrot.lane.b32.xlu0 %v2830, 64
    %v2845 = vpop.permute.xlu0 %2844
    %2846 = vrot.lane.b32.xlu0 %v2833, 64
    %v2847 = vpop.permute.xlu0 %2846
    %v2852 = vadd.f32 %v705, %v2841
    %v2853 = vadd.f32 %v708, %v2843
    %v2854 = vadd.f32 %v713, %v2845
    %v2855 = vadd.f32 %v716, %v2847
    %v2856 = vtanh.pop %v2852
    %v2857 = vtanh.pop %v2853
    %v2858 = vtanh.pop %v2854
    %v2859 = vtanh.pop %v2855
    %2864 = vrot.lane.b32.xlu0 %v32, 32
    %v2865 = vpop.permute.xlu0 %2864
    %2866 = vrot.lane.b32.xlu0 %v33, 32
    %v2867 = vpop.permute.xlu0 %2866
    %2868 = vrot.lane.b32.xlu0 %v34, 32
    %v2869 = vpop.permute.xlu0 %2868
    %2870 = vrot.lane.b32.xlu0 %v35, 32
    %v2871 = vpop.permute.xlu0 %2870
    %v2876 = vmul.f32 %v1783, %v2865
    %v2877 = vmul.f32 %v1785, %v2867
    %v2878 = vmul.f32 %v1787, %v2869
    %v2879 = vmul.f32 %v1789, %v2871
    %v2880 = vsub.f32 1.0, %v1783
    %v2881 = vsub.f32 1.0, %v1785
    %v2882 = vsub.f32 1.0, %v1787
    %v2883 = vsub.f32 1.0, %v1789
    %2888 = vrot.lane.b32.xlu0 %v2856, 96
    %v2889 = vpop.permute.xlu0 %2888
    %2890 = vrot.lane.b32.xlu0 %v2857, 96
    %v2891 = vpop.permute.xlu0 %2890
    %2892 = vrot.lane.b32.xlu0 %v2858, 96
    %v2893 = vpop.permute.xlu0 %2892
    %2894 = vrot.lane.b32.xlu0 %v2859, 96
    %v2895 = vpop.permute.xlu0 %2894
    %v2900 = vmul.f32 %v2880, %v2889
    %v2901 = vmul.f32 %v2881, %v2891
    %v2902 = vmul.f32 %v2882, %v2893
    %v2903 = vmul.f32 %v2883, %v2895
    %v2904 = vadd.f32 %v2876, %v2900
    %v2905 = vadd.f32 %v2877, %v2901
    %v2906 = vadd.f32 %v2878, %v2902
    %v2907 = vadd.f32 %v2879, %v2903
    %2912 = vrot.lane.b32.xlu0 %v2904, 96
    %v2913 = vpop.permute.xlu0 %2912
    %2914 = vrot.lane.b32.xlu0 %v2905, 96
    %v2915 = vpop.permute.xlu0 %2914
    %2916 = vrot.lane.b32.xlu0 %v2906, 96
    %v2917 = vpop.permute.xlu0 %2916
    %2918 = vrot.lane.b32.xlu0 %v2907, 96
    %v2919 = vpop.permute.xlu0 %2918
    %2924 = vst.msk [vmem:[#allocation3] sm:$0xff] %vm176, %v2913
    %2925 = vst.msk [vmem:[#allocation3 + $0x8] sm:$0xff] %vm176, %v2915
    %2926 = vst.msk [vmem:[#allocation3 + $0x10] sm:$0xff] %vm176, %v2917
    %2927 = vst.msk [vmem:[#allocation3 + $0x18] sm:$0xff] %vm176, %v2919
    // Predicated region
    $region30: #{tpu_custom_call.1} parent=1 // pred_check
      _
    $region31: #{tpu_custom_call.1} parent=1 // pred_check_branch
      %2929 = sbr.rel (0) target = $region33
    $region32: #{tpu_custom_call.1} parent=1 // pred_region
      %s2931 = ssub.s32 512, 512
      %2932 = vsyncadd [#allocation4], %s2931
      %s2933 = sshll.u32 [#allocation3], 4
      %s2934 = int_to_ptr.vmem [resolvable:$true] %s2933
      %2939 = dma.vmem_to_hbm [thread:$0]  %s2934, 512, %s7, [#allocation4], 128, 128, 8
    $region33: #{tpu_custom_call.1} parent=1 // pred_fallthru
      _
    // Predicated region
    $region34: #{tpu_custom_call.1} parent=1 // pred_check
      _
    $region35: #{tpu_custom_call.1} parent=1 // pred_check_branch
      %2941 = sbr.rel (0) target = $region37
    $region36: #{tpu_custom_call.1} parent=1 // pred_region
      %2942 = dma.done [#allocation4], 512
    $region37: #{tpu_custom_call.1} parent=1 // pred_fallthru
      _
    %2943 = vsyncpa [#allocation4], 1

</llo_original>
